<compile_context>
chip_gen: v7x
topology: tpu7x:2x2x1
jax: 0.10.0
libtpu: 0.0.40
codegen_flags: <defaults>
</compile_context>

<pallas_src>
import jax
import jax.numpy as jnp
import numpy as np
from jax.experimental import pallas as pl
from jax.experimental.pallas import tpu as pltpu


def _transformer_kernel(xl_ref, xr_ref, wqkv_ref, bqkv_ref, wc_ref, bc_ref,
                        gamma_ref, out_ref):
    """One grid step = one lane-dense (TB, C*H) slab of the batch (NCHW, W squeezed)."""
    TB = xl_ref.shape[0]
    C, F = wqkv_ref.shape
    H = xl_ref.shape[1] // C
    Cq = (F - C) // 2
    mxu_dtype = wqkv_ref.dtype          # bf16 weights => single-pass bf16 MXU

    # Lane-dense block -> NCHW view -> channels-last (TB*H, C): the whole slab
    # fills the MXU M dimension with ONE tall matmul per projection.  The
    # minor-dim swap runs on the XLU, which is idle here.
    # TODO(synk): if a bundle dump shows these reshapes materializing VMEM
    #             copies, switch to a pltpu.einshape combined reshape+transpose.
    x_nch = xl_ref[...].reshape(TB, C, H)
    x2 = jnp.transpose(x_nch, (0, 2, 1)).reshape(TB * H, C)

    # Fused v|q|k projection (1x1 conv + eval-mode BN folded) + ReLU: one matmul.
    qkv = jnp.dot(x2.astype(mxu_dtype), wqkv_ref[...],
                  preferred_element_type=jnp.float32)
    qkv = jnp.maximum(qkv + bqkv_ref[...], 0.0)           # f32 VPU math (v5e-safe)

    # [Wv | Wq | Wk] ordering: v (width C) is the lane-aligned leading slice;
    # q/k are the small trailing slices.
    v = qkv[:, :C].reshape(TB, H, C)
    q = qkv[:, C:C + Cq].reshape(TB, H, Cq)
    k = qkv[:, C + Cq:].reshape(TB, H, Cq)

    # scores[b,i,j] = <q_bi, k_bj>; softmax over j (PyTorch dim=2, no 1/sqrt(d)).
    # MXU operands cast to bf16 (weight dtype); softmax math stays f32.
    s = jnp.einsum("bic,bjc->bij", q.astype(mxu_dtype), k.astype(mxu_dtype),
                   preferred_element_type=jnp.float32)
    s = s - jnp.max(s, axis=-1, keepdims=True)
    p = jnp.exp(s)
    att = p * pl.reciprocal(jnp.sum(p, axis=-1, keepdims=True), approx=True)

    # out[b,i,:] = sum_j att[b,i,j] * v[b,j,:]  (== bmm(v1, att^T) in NCHW terms)
    o = jnp.einsum("bij,bjc->bic", att.astype(mxu_dtype), v.astype(mxu_dtype),
                   preferred_element_type=jnp.float32)

    # Final 1x1 conv + BN + ReLU: one tall matmul over the slab.
    o2 = jnp.dot(o.reshape(TB * H, C).astype(mxu_dtype), wc_ref[...],
                 preferred_element_type=jnp.float32)
    o2 = jnp.maximum(o2 + bc_ref[...], 0.0)               # (TB*H, C), f32

    # Residual in the native NCHW layout; gamma is a scalar read from SMEM.
    o_nch = jnp.transpose(o2.reshape(TB, H, C), (0, 2, 1))          # (TB, C, H)
    res = xr_ref[...].reshape(TB, C, H) + gamma_ref[0] * o_nch
    out_ref[...] = res.reshape(TB, C * H)                           # lane-dense store


def _choose_tb(B, C, H, F, *, vmem_budget_bytes=40 << 20, target_steps=4):
    """Pick the batch tile so the grid has ~target_steps steps (>=2 feeds both
    v7x TensorCores and enables DMA/compute overlap), the (tb, C*H) block stays
    sublane-aligned (tb % 8 == 0), and the per-step working set fits comfortably
    inside the VMEM budget (v7x has only 64 MiB physical)."""
    cands = [t for t in range(8, B, 8) if B % t == 0]
    if not cands:
        return B                        # tiny batch: one full-array step

    def step_bytes(t):
        rows = t * H
        stream = 3 * 2 * t * C * H * 4              # xl/xr/out, double-buffered
        body = 2 * rows * (C + F) * 4               # channels-last x + qkv
        body += 2 * t * H * H * 4                   # scores + att
        body += 3 * rows * C * 4                    # v / o / o2
        return stream + body

    ok = [t for t in cands if step_bytes(t) <= vmem_budget_bytes]
    if not ok:
        return min(cands)
    return min(ok, key=lambda t: (abs(B // t - target_steps), -t))


def transformer_forward(x_row, x_local, params, *, tb=None,
                        vmem_limit_bytes=48 * 1024 * 1024):
    """x_row, x_local: NCHW float32 arrays of shape (B, C, H, 1)."""
    B, C, H, W = x_local.shape
    assert W == 1, "module squeezes dim 3, so W must be 1"
    F = params["wqkv"].shape[1]
    Cq = (F - C) // 2
    if tb is None:
        tb = _choose_tb(B, C, H, F)
    assert B % tb == 0 and (tb == B or tb % 8 == 0)

    # Contiguity-preserving reshapes only (free): streamed blocks are lane-dense
    # (tb, C*H) slabs; no wrapper-side HBM transposes.
    xl = x_local[..., 0].reshape(B, C * H)
    xr = x_row[..., 0].reshape(B, C * H)

    flops = (2 * B * H * C * F            # fused q|k|v projection
             + 2 * B * H * H * Cq         # attention scores
             + 2 * B * H * H * C          # attention output
             + 2 * B * H * C * C)         # final 1x1 conv
    cost = pl.CostEstimate(
        flops=int(flops),
        transcendentals=int(B * H * H + B * H),     # exp + reciprocal
        bytes_accessed=int(3 * B * C * H * 4
                           + (params["wqkv"].size + params["wc"].size)
                           * params["wqkv"].dtype.itemsize
                           + (params["bqkv"].size + params["bc"].size) * 4))

    out = pl.pallas_call(
        _transformer_kernel,
        out_shape=jax.ShapeDtypeStruct((B, C * H), jnp.float32),
        grid_spec=pltpu.PrefetchScalarGridSpec(
            num_scalar_prefetch=0,
            grid=(B // tb,),
            in_specs=[
                pl.BlockSpec((tb, C * H), lambda b: (b, 0)),        # x_local
                pl.BlockSpec((tb, C * H), lambda b: (b, 0)),        # x_row
                pl.BlockSpec((C, F), lambda b: (0, 0)),             # fused Wv|Wq|Wk
                pl.BlockSpec((1, F), lambda b: (0, 0)),             # fused bias
                pl.BlockSpec((C, C), lambda b: (0, 0)),             # Wc
                pl.BlockSpec((1, C), lambda b: (0, 0)),             # bc
                pl.BlockSpec(memory_space=pltpu.MemorySpace.SMEM),  # gamma scalar
            ],
            out_specs=pl.BlockSpec((tb, C * H), lambda b: (b, 0)),
        ),
        compiler_params=pltpu.CompilerParams(
            dimension_semantics=("parallel",),
            # Budgeted for v7x's 64 MiB physical VMEM; on v6e/v5e (128 MiB)
            # this can be raised (64-96 MiB) together with a bigger tb.
            vmem_limit_bytes=vmem_limit_bytes),
        cost_estimate=cost,
    )(xl, xr, params["wqkv"], params["bqkv"], params["wc"], params["bc"],
      params["gamma"])

    return out.reshape(B, C, H)[..., None]          # back to NCHW (B, C, H, 1)


def make_params(key, C, *, mxu_dtype=jnp.bfloat16):
    """Deterministic synthetic parameters; 1x1 conv + eval-mode BN folded.
    Matmul weights stored in `mxu_dtype` (bf16 => single-pass bf16 MXU path);
    biases and gamma stay f32 since all VPU math is f32."""
    Cq = C // 4
    eps = 1e-5
    keys = jax.random.split(key, 16)

    def conv_bn(kw, kb, kg, kbeta, cin, cout):
        w = 0.1 * jax.random.normal(kw, (cout, cin), jnp.float32)       # conv 1x1
        b = 0.1 * jax.random.normal(kb, (cout,), jnp.float32)           # conv bias
        bn_w = 1.0 + 0.1 * jax.random.normal(kg, (cout,), jnp.float32)  # BN gamma
        bn_b = 0.1 * jax.random.normal(kbeta, (cout,), jnp.float32)     # BN beta
        run_mean = jnp.zeros((cout,), jnp.float32)
        run_var = jnp.ones((cout,), jnp.float32)
        scale = bn_w / jnp.sqrt(run_var + eps)
        w_eff = (w * scale[:, None]).T                                  # (cin, cout)
        b_eff = (scale * (b - run_mean) + bn_b)[None, :]                # (1, cout)
        return w_eff, b_eff

    wq, bq = conv_bn(keys[0], keys[1], keys[2], keys[3], C, Cq)
    wk, bk = conv_bn(keys[4], keys[5], keys[6], keys[7], C, Cq)
    wv, bv = conv_bn(keys[8], keys[9], keys[10], keys[11], C, C)
    wc, bc = conv_bn(keys[12], keys[13], keys[14], keys[15], C, C)

    # Fuse the three projections in [Wv | Wq | Wk] order: v (width C) becomes a
    # lane-aligned leading slice of the fused output; q/k are small trailers.
    wqkv = jnp.concatenate([wv, wq, wk], axis=1).astype(mxu_dtype)
    bqkv = jnp.concatenate([bv, bq, bk], axis=1)
    wc = wc.astype(mxu_dtype)

    # PyTorch init is gamma = 0 (output == x_row); use 0.5 so the attention
    # path actually contributes in this synthetic test.  1-D scalar => SMEM.
    gamma = jnp.full((1,), 0.5, jnp.float32)
    return dict(wqkv=wqkv, bqkv=bqkv, wc=wc, bc=bc, gamma=gamma)


def _reference_forward(x_row, x_local, p):
    """Pure-JAX f32 reference mirroring the PyTorch forward (folded conv + BN)."""
    B, C, H, _ = x_local.shape
    F = p["wqkv"].shape[1]
    Cq = (F - C) // 2
    xl = jnp.transpose(x_local[..., 0], (0, 2, 1))   # (B, H, C)
    xr = jnp.transpose(x_row[..., 0], (0, 2, 1))
    wqkv = p["wqkv"].astype(jnp.float32)
    wc = p["wc"].astype(jnp.float32)
    qkv = jax.nn.relu(jnp.dot(xl, wqkv) + p["bqkv"])
    v, q, k = qkv[..., :C], qkv[..., C:C + Cq], qkv[..., C + Cq:]
    scores = jnp.einsum("bic,bjc->bij", q, k)
    att = jax.nn.softmax(scores, axis=2)
    o = jnp.einsum("bij,bjc->bic", att, v)
    o = jax.nn.relu(jnp.dot(o, wc) + p["bc"])
    out = xr + p["gamma"][0] * o
    return jnp.transpose(out, (0, 2, 1))[..., None]


if __name__ == "__main__":
    # in_channel = 16 -> C//4 = 4; spatial = (16, 1); batch 32 => grid of 4
    # parallel steps (tb = 8) so the pipeline / megacore paths are exercised.
    B, C, H = 32, 16, 16
    key = jax.random.PRNGKey(0)
    k_row, k_loc, k_par = jax.random.split(key, 3)

    x_row = jax.random.normal(k_row, (B, C, H, 1), jnp.float32)
    x_local = jax.random.normal(k_loc, (B, C, H, 1), jnp.float32)
    params = make_params(k_par, C)

    out = jax.block_until_ready(transformer_forward(x_row, x_local, params))

    ref = _reference_forward(x_row, x_local, params)
    # Tolerance covers the bf16 MXU-operand casts and the EUP approximate
    # reciprocal in the softmax normalization; all other math is f32.
    np.testing.assert_allclose(np.asarray(out), np.asarray(ref),
                               rtol=1e-2, atol=1e-2)
    assert out.shape == x_row.shape and out.dtype == jnp.float32
    print("KERNEL_OK")
</pallas_src>

<mosaic_0001>
module attributes {stable_mosaic.version = 11 : i64} {
  func.func @_transformer_kernel(%arg0: i32, %arg1: memref<8x256xf32, #tpu.memory_space<vmem>>, %arg2: memref<8x256xf32, #tpu.memory_space<vmem>>, %arg3: memref<16x24xbf16, #tpu.memory_space<vmem>>, %arg4: memref<1x24xf32, #tpu.memory_space<vmem>>, %arg5: memref<16x16xbf16, #tpu.memory_space<vmem>>, %arg6: memref<1x16xf32, #tpu.memory_space<vmem>>, %arg7: memref<1xf32, #tpu.memory_space<smem>>, %arg8: memref<8x256xf32, #tpu.memory_space<vmem>>) attributes {dimension_semantics = [#tpu.dimension_semantics<parallel>], iteration_bounds = array<i64: 4>, scalar_prefetch = 0 : i64, scratch_operands = 0 : i64, tpu.core_type = #tpu.core_type<tc>, window_params = [{transform_indices = @transform_0, window_bounds = array<i64: 8, 256>}, {transform_indices = @transform_1, window_bounds = array<i64: 8, 256>}, {pipeline_mode = #tpu.pipeline_mode<synchronous>, transform_indices = @transform_2, window_bounds = array<i64: 16, 24>}, {pipeline_mode = #tpu.pipeline_mode<synchronous>, transform_indices = @transform_3, window_bounds = array<i64: 1, 24>}, {pipeline_mode = #tpu.pipeline_mode<synchronous>, transform_indices = @transform_4, window_bounds = array<i64: 16, 16>}, {pipeline_mode = #tpu.pipeline_mode<synchronous>, transform_indices = @transform_5, window_bounds = array<i64: 1, 16>}, {transform_indices = @transform_6, window_bounds = array<i64: 1>}, {transform_indices = @transform_7, window_bounds = array<i64: 8, 256>}]} {
    %c0 = arith.constant 0 : index
    %c0_0 = arith.constant 0 : index
    %0 = vector.load %arg1[%c0, %c0_0] : memref<8x256xf32, #tpu.memory_space<vmem>>, vector<8x256xf32>
    %1 = vector.shape_cast %0 : vector<8x256xf32> to vector<8x16x16xf32>
    %2 = tpu.transpose %1, [0, 2, 1] : vector<8x16x16xf32> -> vector<8x16x16xf32>
    %3 = vector.shape_cast %2 : vector<8x16x16xf32> to vector<128x16xf32>
    %4 = arith.truncf %3 : vector<128x16xf32> to vector<128x16xbf16>
    %c0_1 = arith.constant 0 : index
    %c0_2 = arith.constant 0 : index
    %5 = vector.load %arg3[%c0_1, %c0_2] : memref<16x24xbf16, #tpu.memory_space<vmem>>, vector<16x24xbf16>
    %cst = arith.constant dense<0.000000e+00> : vector<128x24xf32>
    %6 = tpu.matmul %4, %5, %cst {dimension_numbers = #tpu.dot_dimension_numbers<[1], [0], [0], [1], [0, 0, 1, 1], [], []>} : vector<128x16xbf16>, vector<16x24xbf16>, vector<128x24xf32> -> vector<128x24xf32>
    %c0_3 = arith.constant 0 : index
    %c0_4 = arith.constant 0 : index
    %7 = vector.load %arg4[%c0_3, %c0_4] : memref<1x24xf32, #tpu.memory_space<vmem>>, vector<1x24xf32>
    %8 = vector.broadcast %7 : vector<1x24xf32> to vector<128x24xf32>
    %9 = arith.addf %6, %8 : vector<128x24xf32>
    %cst_5 = arith.constant 0.000000e+00 : f32
    %10 = vector.broadcast %cst_5 : f32 to vector<128x24xf32>
    %11 = arith.maximumf %9, %10 : vector<128x24xf32>
    %12 = vector.extract_strided_slice %11 {offsets = [0, 0], sizes = [128, 16], strides = [1, 1]} : vector<128x24xf32> to vector<128x16xf32>
    %13 = vector.shape_cast %12 : vector<128x16xf32> to vector<8x16x16xf32>
    %14 = vector.extract_strided_slice %11 {offsets = [0, 16], sizes = [128, 4], strides = [1, 1]} : vector<128x24xf32> to vector<128x4xf32>
    %15 = vector.shape_cast %14 : vector<128x4xf32> to vector<8x16x4xf32>
    %16 = vector.extract_strided_slice %11 {offsets = [0, 20], sizes = [128, 4], strides = [1, 1]} : vector<128x24xf32> to vector<128x4xf32>
    %17 = vector.shape_cast %16 : vector<128x4xf32> to vector<8x16x4xf32>
    %18 = arith.truncf %15 : vector<8x16x4xf32> to vector<8x16x4xbf16>
    %19 = arith.truncf %17 : vector<8x16x4xf32> to vector<8x16x4xbf16>
    "tpu.trace_start"() <{level = 10 : i32, message = "bic,bjc->bij"}> : () -> ()
    %cst_6 = arith.constant dense<0.000000e+00> : vector<8x16x16xf32>
    %20 = tpu.matmul %18, %19, %cst_6 {dimension_numbers = #tpu.dot_dimension_numbers<[2], [2], [1], [1], [0, 0, 0, 1, 1, 1], [0], [0]>} : vector<8x16x4xbf16>, vector<8x16x4xbf16>, vector<8x16x16xf32> -> vector<8x16x16xf32>
    "tpu.trace_stop"() : () -> ()
    %cst_7 = arith.constant dense<0xFF800000> : vector<8x16xf32>
    %21 = vector.multi_reduction <maximumf>, %20, %cst_7 [2] : vector<8x16x16xf32> to vector<8x16xf32>
    %22 = vector.shape_cast %21 : vector<8x16xf32> to vector<8x16x1xf32>
    %23 = vector.broadcast %22 : vector<8x16x1xf32> to vector<8x16x16xf32>
    %24 = arith.subf %20, %23 : vector<8x16x16xf32>
    %25 = math.exp %24 : vector<8x16x16xf32>
    %cst_8 = arith.constant dense<0.000000e+00> : vector<8x16xf32>
    %26 = vector.multi_reduction <add>, %25, %cst_8 [2] : vector<8x16x16xf32> to vector<8x16xf32>
    %27 = vector.shape_cast %26 : vector<8x16xf32> to vector<8x16x1xf32>
    %28 = tpu.reciprocal %27 {approx = true} : vector<8x16x1xf32> -> vector<8x16x1xf32>
    %29 = vector.broadcast %28 : vector<8x16x1xf32> to vector<8x16x16xf32>
    %30 = arith.mulf %25, %29 : vector<8x16x16xf32>
    %31 = arith.truncf %30 : vector<8x16x16xf32> to vector<8x16x16xbf16>
    %32 = arith.truncf %13 : vector<8x16x16xf32> to vector<8x16x16xbf16>
    "tpu.trace_start"() <{level = 10 : i32, message = "bij,bjc->bic"}> : () -> ()
    %cst_9 = arith.constant dense<0.000000e+00> : vector<8x16x16xf32>
    %33 = tpu.matmul %31, %32, %cst_9 {dimension_numbers = #tpu.dot_dimension_numbers<[2], [1], [1], [2], [0, 0, 0, 1, 1, 2], [0], [0]>} : vector<8x16x16xbf16>, vector<8x16x16xbf16>, vector<8x16x16xf32> -> vector<8x16x16xf32>
    "tpu.trace_stop"() : () -> ()
    %34 = vector.shape_cast %33 : vector<8x16x16xf32> to vector<128x16xf32>
    %35 = arith.truncf %34 : vector<128x16xf32> to vector<128x16xbf16>
    %c0_10 = arith.constant 0 : index
    %c0_11 = arith.constant 0 : index
    %36 = vector.load %arg5[%c0_10, %c0_11] : memref<16x16xbf16, #tpu.memory_space<vmem>>, vector<16x16xbf16>
    %cst_12 = arith.constant dense<0.000000e+00> : vector<128x16xf32>
    %37 = tpu.matmul %35, %36, %cst_12 {dimension_numbers = #tpu.dot_dimension_numbers<[1], [0], [0], [1], [0, 0, 1, 1], [], []>} : vector<128x16xbf16>, vector<16x16xbf16>, vector<128x16xf32> -> vector<128x16xf32>
    %c0_13 = arith.constant 0 : index
    %c0_14 = arith.constant 0 : index
    %38 = vector.load %arg6[%c0_13, %c0_14] : memref<1x16xf32, #tpu.memory_space<vmem>>, vector<1x16xf32>
    %39 = vector.broadcast %38 : vector<1x16xf32> to vector<128x16xf32>
    %40 = arith.addf %37, %39 : vector<128x16xf32>
    %cst_15 = arith.constant 0.000000e+00 : f32
    %41 = vector.broadcast %cst_15 : f32 to vector<128x16xf32>
    %42 = arith.maximumf %40, %41 : vector<128x16xf32>
    %43 = vector.shape_cast %42 : vector<128x16xf32> to vector<8x16x16xf32>
    %44 = tpu.transpose %43, [0, 2, 1] : vector<8x16x16xf32> -> vector<8x16x16xf32>
    %c0_16 = arith.constant 0 : index
    %c0_17 = arith.constant 0 : index
    %45 = vector.load %arg2[%c0_16, %c0_17] : memref<8x256xf32, #tpu.memory_space<vmem>>, vector<8x256xf32>
    %46 = vector.shape_cast %45 : vector<8x256xf32> to vector<8x16x16xf32>
    %c0_18 = arith.constant 0 : index
    %47 = memref.load %arg7[%c0_18] : memref<1xf32, #tpu.memory_space<smem>>
    %48 = vector.broadcast %47 : f32 to vector<8x16x16xf32>
    %49 = arith.mulf %48, %44 : vector<8x16x16xf32>
    %50 = arith.addf %46, %49 : vector<8x16x16xf32>
    %51 = vector.shape_cast %50 : vector<8x16x16xf32> to vector<8x256xf32>
    %c0_19 = arith.constant 0 : index
    %c0_20 = arith.constant 0 : index
    %52 = vector.load %arg8[%c0_19, %c0_20] : memref<8x256xf32, #tpu.memory_space<vmem>>, vector<8x256xf32>
    tpu.vector_store %arg8[%c0_19, %c0_20], %51 {strides = array<i32>} : memref<8x256xf32, #tpu.memory_space<vmem>>, vector<8x256xf32>,
    return
  }
  func.func @transform_0(%arg0: i32) -> (i32, i32) {
    %c0_i32 = arith.constant 0 : i32
    %c0_i32_0 = arith.constant 0 : i32
    return %arg0, %c0_i32 : i32, i32
  }
  func.func @transform_1(%arg0: i32) -> (i32, i32) {
    %c0_i32 = arith.constant 0 : i32
    %c0_i32_0 = arith.constant 0 : i32
    return %arg0, %c0_i32 : i32, i32
  }
  func.func @transform_2(%arg0: i32) -> (i32, i32) {
    %c0_i32 = arith.constant 0 : i32
    %c0_i32_0 = arith.constant 0 : i32
    %c0_i32_1 = arith.constant 0 : i32
    return %c0_i32, %c0_i32_0 : i32, i32
  }
  func.func @transform_3(%arg0: i32) -> (i32, i32) {
    %c0_i32 = arith.constant 0 : i32
    %c0_i32_0 = arith.constant 0 : i32
    %c0_i32_1 = arith.constant 0 : i32
    return %c0_i32, %c0_i32_0 : i32, i32
  }
  func.func @transform_4(%arg0: i32) -> (i32, i32) {
    %c0_i32 = arith.constant 0 : i32
    %c0_i32_0 = arith.constant 0 : i32
    %c0_i32_1 = arith.constant 0 : i32
    return %c0_i32, %c0_i32_0 : i32, i32
  }
  func.func @transform_5(%arg0: i32) -> (i32, i32) {
    %c0_i32 = arith.constant 0 : i32
    %c0_i32_0 = arith.constant 0 : i32
    %c0_i32_1 = arith.constant 0 : i32
    return %c0_i32, %c0_i32_0 : i32, i32
  }
  func.func @transform_6(%arg0: i32) -> i32 {
    %c0_i32 = arith.constant 0 : i32
    %c0_i32_0 = arith.constant 0 : i32
    return %c0_i32 : i32
  }
  func.func @transform_7(%arg0: i32) -> (i32, i32) {
    %c0_i32 = arith.constant 0 : i32
    %c0_i32_0 = arith.constant 0 : i32
    return %arg0, %c0_i32 : i32, i32
  }
}

</mosaic_0001>

<llo_original>
// kernel: tpu_custom_call.1
$region0: #{tpu_custom_call.1}
  #allocation0 [shape = 'u32[]', space=smem, size = 0x4, offset = 0x4, fixed_abs, tag = 'smem constant byte address 0x4 - core index']
  #allocation1 [shape = 'u32[144,128]{1,0:T(1,128)}', space=vmem, size = 0x12000, scoped, tag = 'internal scratch']
  #allocation2 [shape = 'f32[1]{0:T(128)S(6)}', space=smem, size = 0x200, scoped, tag = 'scoped memory for tpu_custom_call.1']
  %s0 = inlined_call_operand.hbm [shape: f32[32,256], index: 0, kind: input, shape index: {}]
  %s1 = inlined_call_operand.hbm [shape: f32[32,256], index: 1, kind: input, shape index: {}]
  %s2 = inlined_call_operand.vmem [shape: bf16[16,24], index: 2, kind: input, shape index: {}]
  %s3 = inlined_call_operand.vmem [shape: f32[1,24], index: 3, kind: input, shape index: {}]
  %s4 = inlined_call_operand.vmem [shape: bf16[16,16], index: 4, kind: input, shape index: {}]
  %s5 = inlined_call_operand.vmem [shape: f32[1,16], index: 5, kind: input, shape index: {}]
  %s6 = inlined_call_operand.<no memory space> [shape: f32[1], index: 6, kind: input, shape index: {}]
  %s7 = inlined_call_operand.hbm [shape: f32[32,256], index: 7, kind: output, shape index: {}]
  %s8 = sld [smem:[#allocation0]]
  $region69: #{tpu_custom_call.1} parent=0
    _
  %s10 = ssub.s32 1, %s8
  %s11 = scalar_select 0, %s10, %s8
  %12 = sst [smem:[#allocation2]] %s6
  $region1: #{tpu_custom_call.1} parent=0
    #allocation3 [shape = 'u8[16384]{0}', space=vmem, size = 0x4000, scoped, tag = 'input window, operand 0']
    #allocation4 [shape = 's32[2]{0}', space=sflag, size = 0x8, scoped, tag = 'scoped memory for tpu_custom_call.1']
    #allocation5 [shape = 's32[2]{0}', space=sflag, size = 0x8, scoped, tag = 'scoped memory for tpu_custom_call.1']
    #allocation6 [shape = 'u8[16384]{0}', space=vmem, size = 0x4000, scoped, tag = 'input window, operand 1']
    #allocation7 [shape = 's32[2]{0}', space=sflag, size = 0x8, scoped, tag = 'scoped memory for tpu_custom_call.1']
    #allocation8 [shape = 'u8[16384]{0}', space=vmem, size = 0x4000, scoped, tag = 'output window, operand 0']
    %13 = vsyncpa [#allocation4], 0
    %s14 = scalar_lea.sflag [#allocation4], 1
    %15 = vsyncpa %s14, 0
    %16 = vsyncpa [#allocation7], 0
    %s17 = scalar_lea.sflag [#allocation7], 1
    %18 = vsyncpa %s17, 0
    %19 = vsyncpa [#allocation5], 0
    %s20 = scalar_lea.sflag [#allocation5], 1
    %21 = vsyncpa %s20, 0
    loop: start=0, step=1, limit=6
    $region2: #{tpu_custom_call.1} parent=1 // loop_pre_header
      _
    $region3: #{tpu_custom_call.1} parent=1 // loop_header
      %s23 = sphi 0, %s27
      %p24 = scmp.ge.s32.totalorder %s23, 6
      %s33 = sphi 0, %s35
      %s36 = sphi 0, %s33
      %s37 = sphi 0, %s36
      %s53 = sphi 0, %s37
      %s59 = sphi 0, %s61
      %s62 = sphi 0, %s59
      %s63 = sphi 0, %s62
      %s79 = sphi 0, %s63
      %s83 = sphi 0, %s83
      %s85 = sphi 0, %s83
      %s86 = sphi 0, %s85
      %s100 = sphi 0, %s86
      %s104 = sphi 0, %s104
      %s106 = sphi 0, %s104
      %s107 = sphi 0, %s106
      %s121 = sphi 0, %s107
      %s125 = sphi 0, %s125
      %s127 = sphi 0, %s125
      %s128 = sphi 0, %s127
      %s142 = sphi 0, %s128
      %s146 = sphi 0, %s146
      %s148 = sphi 0, %s146
      %s149 = sphi 0, %s148
      %s163 = sphi 0, %s149
      %s167 = sphi 0, %s167
      %s169 = sphi 0, %s167
      %s170 = sphi 0, %s169
      %s184 = sphi 0, %s170
      %s190 = sphi 0, %s192
      %s193 = sphi 0, %s190
      %s194 = sphi 0, %s193
      %s210 = sphi 0, %s194
    $region4: #{tpu_custom_call.1} parent=1 // loop_header_branch
      %26 = sbr.rel (%p24) target = $region8
    $region5: #{tpu_custom_call.1} parent=1 // loop_body
      %s28 = ssub.s32 %s23, 1
      %s29 = ssub.s32 %s23, 2
      %s30 = sadd.s32 %s23, 1
      %s31 = ssub.s32 %s23, %s30
      %p32 = scmp.eq.s32.totalorder %s31, 0
      %s34 = sadd.s32 %s33, 1
      %s35 = scalar_select %p32, %s33, %s34
      %p38 = pneg %p32
      %p39 = scmp.eq.s32.totalorder %s23, 3
      %p40 = por %p38, %p39
      %p41 = scmp.ne.s32.totalorder %s33, %s36
      %p42 = scmp.eq.s32.totalorder %s23, 0
      %p43 = por %p41, %p42
      %p44 = scmp.ne.s32.totalorder %s33, %s36
      %p45 = scmp.eq.s32.totalorder %s28, 3
      %p46 = por %p44, %p45
      %p47 = scmp.ne.s32.totalorder %s36, %s37
      %p48 = scmp.eq.s32.totalorder %s28, 0
      %p49 = por %p47, %p48
      %p50 = scmp.ne.s32.totalorder %s36, %s37
      %p51 = scmp.eq.s32.totalorder %s29, 3
      %p52 = por %p50, %p51
      %p54 = scmp.ne.s32.totalorder %s37, %s53
      %p55 = scmp.eq.s32.totalorder %s29, 0
      %p56 = por %p54, %p55
      %s57 = ssub.s32 %s23, %s30
      %p58 = scmp.eq.s32.totalorder %s57, 0
      %s60 = sadd.s32 %s59, 1
      %s61 = scalar_select %p58, %s59, %s60
      %p64 = pneg %p58
      %p65 = scmp.eq.s32.totalorder %s23, 3
      %p66 = por %p64, %p65
      %p67 = scmp.ne.s32.totalorder %s59, %s62
      %p68 = scmp.eq.s32.totalorder %s23, 0
      %p69 = por %p67, %p68
      %p70 = scmp.ne.s32.totalorder %s59, %s62
      %p71 = scmp.eq.s32.totalorder %s28, 3
      %p72 = por %p70, %p71
      %p73 = scmp.ne.s32.totalorder %s62, %s63
      %p74 = scmp.eq.s32.totalorder %s28, 0
      %p75 = por %p73, %p74
      %p76 = scmp.ne.s32.totalorder %s62, %s63
      %p77 = scmp.eq.s32.totalorder %s29, 3
      %p78 = por %p76, %p77
      %p80 = scmp.ne.s32.totalorder %s63, %s79
      %p81 = scmp.eq.s32.totalorder %s29, 0
      %p82 = por %p80, %p81
      %s84 = sadd.s32 %s83, 1
      %p87 = scmp.eq.s32.totalorder %s23, 3
      %p88 = scmp.ne.s32.totalorder %s83, %s85
      %p89 = scmp.eq.s32.totalorder %s23, 0
      %p90 = por %p88, %p89
      %p91 = scmp.ne.s32.totalorder %s83, %s85
      %p92 = scmp.eq.s32.totalorder %s28, 3
      %p93 = por %p91, %p92
      %p94 = scmp.ne.s32.totalorder %s85, %s86
      %p95 = scmp.eq.s32.totalorder %s28, 0
      %p96 = por %p94, %p95
      %p97 = scmp.ne.s32.totalorder %s85, %s86
      %p98 = scmp.eq.s32.totalorder %s29, 3
      %p99 = por %p97, %p98
      %p101 = scmp.ne.s32.totalorder %s86, %s100
      %p102 = scmp.eq.s32.totalorder %s29, 0
      %p103 = por %p101, %p102
      %s105 = sadd.s32 %s104, 1
      %p108 = scmp.eq.s32.totalorder %s23, 3
      %p109 = scmp.ne.s32.totalorder %s104, %s106
      %p110 = scmp.eq.s32.totalorder %s23, 0
      %p111 = por %p109, %p110
      %p112 = scmp.ne.s32.totalorder %s104, %s106
      %p113 = scmp.eq.s32.totalorder %s28, 3
      %p114 = por %p112, %p113
      %p115 = scmp.ne.s32.totalorder %s106, %s107
      %p116 = scmp.eq.s32.totalorder %s28, 0
      %p117 = por %p115, %p116
      %p118 = scmp.ne.s32.totalorder %s106, %s107
      %p119 = scmp.eq.s32.totalorder %s29, 3
      %p120 = por %p118, %p119
      %p122 = scmp.ne.s32.totalorder %s107, %s121
      %p123 = scmp.eq.s32.totalorder %s29, 0
      %p124 = por %p122, %p123
      %s126 = sadd.s32 %s125, 1
      %p129 = scmp.eq.s32.totalorder %s23, 3
      %p130 = scmp.ne.s32.totalorder %s125, %s127
      %p131 = scmp.eq.s32.totalorder %s23, 0
      %p132 = por %p130, %p131
      %p133 = scmp.ne.s32.totalorder %s125, %s127
      %p134 = scmp.eq.s32.totalorder %s28, 3
      %p135 = por %p133, %p134
      %p136 = scmp.ne.s32.totalorder %s127, %s128
      %p137 = scmp.eq.s32.totalorder %s28, 0
      %p138 = por %p136, %p137
      %p139 = scmp.ne.s32.totalorder %s127, %s128
      %p140 = scmp.eq.s32.totalorder %s29, 3
      %p141 = por %p139, %p140
      %p143 = scmp.ne.s32.totalorder %s128, %s142
      %p144 = scmp.eq.s32.totalorder %s29, 0
      %p145 = por %p143, %p144
      %s147 = sadd.s32 %s146, 1
      %p150 = scmp.eq.s32.totalorder %s23, 3
      %p151 = scmp.ne.s32.totalorder %s146, %s148
      %p152 = scmp.eq.s32.totalorder %s23, 0
      %p153 = por %p151, %p152
      %p154 = scmp.ne.s32.totalorder %s146, %s148
      %p155 = scmp.eq.s32.totalorder %s28, 3
      %p156 = por %p154, %p155
      %p157 = scmp.ne.s32.totalorder %s148, %s149
      %p158 = scmp.eq.s32.totalorder %s28, 0
      %p159 = por %p157, %p158
      %p160 = scmp.ne.s32.totalorder %s148, %s149
      %p161 = scmp.eq.s32.totalorder %s29, 3
      %p162 = por %p160, %p161
      %p164 = scmp.ne.s32.totalorder %s149, %s163
      %p165 = scmp.eq.s32.totalorder %s29, 0
      %p166 = por %p164, %p165
      %s168 = sadd.s32 %s167, 1
      %p171 = scmp.eq.s32.totalorder %s23, 3
      %p172 = scmp.ne.s32.totalorder %s167, %s169
      %p173 = scmp.eq.s32.totalorder %s23, 0
      %p174 = por %p172, %p173
      %p175 = scmp.ne.s32.totalorder %s167, %s169
      %p176 = scmp.eq.s32.totalorder %s28, 3
      %p177 = por %p175, %p176
      %p178 = scmp.ne.s32.totalorder %s169, %s170
      %p179 = scmp.eq.s32.totalorder %s28, 0
      %p180 = por %p178, %p179
      %p181 = scmp.ne.s32.totalorder %s169, %s170
      %p182 = scmp.eq.s32.totalorder %s29, 3
      %p183 = por %p181, %p182
      %p185 = scmp.ne.s32.totalorder %s170, %s184
      %p186 = scmp.eq.s32.totalorder %s29, 0
      %p187 = por %p185, %p186
      %s188 = ssub.s32 %s23, %s30
      %p189 = scmp.eq.s32.totalorder %s188, 0
      %s191 = sadd.s32 %s190, 1
      %s192 = scalar_select %p189, %s190, %s191
      %p195 = pneg %p189
      %p196 = scmp.eq.s32.totalorder %s23, 3
      %p197 = por %p195, %p196
      %p198 = scmp.ne.s32.totalorder %s190, %s193
      %p199 = scmp.eq.s32.totalorder %s23, 0
      %p200 = por %p198, %p199
      %p201 = scmp.ne.s32.totalorder %s190, %s193
      %p202 = scmp.eq.s32.totalorder %s28, 3
      %p203 = por %p201, %p202
      %p204 = scmp.ne.s32.totalorder %s193, %s194
      %p205 = scmp.eq.s32.totalorder %s28, 0
      %p206 = por %p204, %p205
      %p207 = scmp.ne.s32.totalorder %s193, %s194
      %p208 = scmp.eq.s32.totalorder %s29, 3
      %p209 = por %p207, %p208
      %p211 = scmp.ne.s32.totalorder %s194, %s210
      %p212 = scmp.eq.s32.totalorder %s29, 0
      %p213 = por %p211, %p212
      %p214 = scmp.le.s32.totalorder 1, %s23
      %p215 = scmp.lt.s32.totalorder %s23, 5
      %p216 = pnand %p214, %p215
      %p217 = pneg %p216
      // Predicated region
      $region9: #{tpu_custom_call.1} parent=5 // pred_check
        _
      $region10: #{tpu_custom_call.1} parent=5 // pred_check_branch
        %219 = sbr.rel (%p216) target = $region12
      $region11: #{tpu_custom_call.1} parent=5 // pred_region
        %s220 = ssub.s32 %s23, 1
        // Predicated region
        $region13: #{tpu_custom_call.1} parent=11 // pred_check
          %p221 = pneg %p96
        $region14: #{tpu_custom_call.1} parent=11 // pred_check_branch
          %223 = sbr.rel (%p221) target = $region16
        $region15: #{tpu_custom_call.1} parent=11 // pred_region
          _
        $region16: #{tpu_custom_call.1} parent=11 // pred_fallthru
          _
        // Predicated region
        $region17: #{tpu_custom_call.1} parent=11 // pred_check
          %p224 = pneg %p117
        $region18: #{tpu_custom_call.1} parent=11 // pred_check_branch
          %226 = sbr.rel (%p224) target = $region20
        $region19: #{tpu_custom_call.1} parent=11 // pred_region
          _
        $region20: #{tpu_custom_call.1} parent=11 // pred_fallthru
          _
        // Predicated region
        $region21: #{tpu_custom_call.1} parent=11 // pred_check
          %p227 = pneg %p138
        $region22: #{tpu_custom_call.1} parent=11 // pred_check_branch
          %229 = sbr.rel (%p227) target = $region24
        $region23: #{tpu_custom_call.1} parent=11 // pred_region
          _
        $region24: #{tpu_custom_call.1} parent=11 // pred_fallthru
          _
        // Predicated region
        $region25: #{tpu_custom_call.1} parent=11 // pred_check
          %p230 = pneg %p159
        $region26: #{tpu_custom_call.1} parent=11 // pred_check_branch
          %232 = sbr.rel (%p230) target = $region28
        $region27: #{tpu_custom_call.1} parent=11 // pred_region
          _
        $region28: #{tpu_custom_call.1} parent=11 // pred_fallthru
          _
        // Predicated region
        $region29: #{tpu_custom_call.1} parent=11 // pred_check
          %p233 = pneg %p180
        $region30: #{tpu_custom_call.1} parent=11 // pred_check_branch
          %235 = sbr.rel (%p233) target = $region32
        $region31: #{tpu_custom_call.1} parent=11 // pred_region
          _
        $region32: #{tpu_custom_call.1} parent=11 // pred_fallthru
          _
      $region12: #{tpu_custom_call.1} parent=5 // pred_fallthru
        _
      %p236 = scmp.lt.s32.totalorder %s23, 4
      // Predicated region
      $region33: #{tpu_custom_call.1} parent=5 // pred_check
        %p237 = pneg %p236
      $region34: #{tpu_custom_call.1} parent=5 // pred_check_branch
        %239 = sbr.rel (%p237) target = $region36
      $region35: #{tpu_custom_call.1} parent=5 // pred_region
        // Predicated region
        $region37: #{tpu_custom_call.1} parent=35 // pred_check
          %p240 = pneg %p43
        $region38: #{tpu_custom_call.1} parent=35 // pred_check_branch
          %242 = sbr.rel (%p240) target = $region40
        $region39: #{tpu_custom_call.1} parent=35 // pred_region
          %s243 = sand.u32 %s33, 1
          %s244 = scalar_lea.sflag [#allocation4], %s243
          %s245 = sand.u32 %s33, 1
          %s246 = smul.addr %s245, 16
          %s247 = scalar_lea.vmem [#allocation3], %s246
          %s249 = ssub.s32 256, 256
          %250 = vsyncadd %s244, %s249
          %s251 = smul.addr %s23, 2
          %s252 = smul.addr %s251, 128
          %s253 = scalar_lea.hbm %s0, %s252
          %s255 = sshll.u32 %s247, 4
          %s256 = int_to_ptr.vmem [resolvable:$true] %s255
          %258 = dma.hbm_to_vmem [thread:$0]  %s253, 256, %s256, %s244
        $region40: #{tpu_custom_call.1} parent=35 // pred_fallthru
          _
        // Predicated region
        $region41: #{tpu_custom_call.1} parent=35 // pred_check
          %p259 = pneg %p69
        $region42: #{tpu_custom_call.1} parent=35 // pred_check_branch
          %261 = sbr.rel (%p259) target = $region44
        $region43: #{tpu_custom_call.1} parent=35 // pred_region
          %s262 = sand.u32 %s59, 1
          %s263 = scalar_lea.sflag [#allocation7], %s262
          %s264 = sand.u32 %s59, 1
          %s265 = smul.addr %s264, 16
          %s266 = scalar_lea.vmem [#allocation6], %s265
          %s268 = ssub.s32 256, 256
          %269 = vsyncadd %s263, %s268
          %s270 = smul.addr %s23, 2
          %s271 = smul.addr %s270, 128
          %s272 = scalar_lea.hbm %s1, %s271
          %s274 = sshll.u32 %s266, 4
          %s275 = int_to_ptr.vmem [resolvable:$true] %s274
          %277 = dma.hbm_to_vmem [thread:$0]  %s272, 256, %s275, %s263
        $region44: #{tpu_custom_call.1} parent=35 // pred_fallthru
          _
      $region36: #{tpu_custom_call.1} parent=5 // pred_fallthru
        _
      %p278 = scmp.le.s32.totalorder 1, %s23
      %p279 = scmp.lt.s32.totalorder %s23, 5
      %p280 = pnand %p278, %p279
      %p281 = pneg %p280
      // Predicated region
      $region45: #{tpu_custom_call.1} parent=5 // pred_check
        _
      $region46: #{tpu_custom_call.1} parent=5 // pred_check_branch
        %283 = sbr.rel (%p280) target = $region48
      $region47: #{tpu_custom_call.1} parent=5 // pred_region
        %s284 = ssub.s32 %s23, 1
        %s285 = sand.u32 %s36, 1
        %s286 = scalar_lea.sflag [#allocation4], %s285
        %s287 = sand.u32 %s36, 1
        %s288 = smul.addr %s287, 16
        %s289 = scalar_lea.vmem [#allocation3], %s288
        // Predicated region
        $region49: #{tpu_custom_call.1} parent=47 // pred_check
          %p290 = pneg %p49
        $region50: #{tpu_custom_call.1} parent=47 // pred_check_branch
          %292 = sbr.rel (%p290) target = $region52
        $region51: #{tpu_custom_call.1} parent=47 // pred_region
          %293 = dma.done %s286, 256
        $region52: #{tpu_custom_call.1} parent=47 // pred_fallthru
          _
        %s294 = sand.u32 %s62, 1
        %s295 = scalar_lea.sflag [#allocation7], %s294
        %s296 = sand.u32 %s62, 1
        %s297 = smul.addr %s296, 16
        %s298 = scalar_lea.vmem [#allocation6], %s297
        // Predicated region
        $region53: #{tpu_custom_call.1} parent=47 // pred_check
          %p299 = pneg %p75
        $region54: #{tpu_custom_call.1} parent=47 // pred_check_branch
          %301 = sbr.rel (%p299) target = $region56
        $region55: #{tpu_custom_call.1} parent=47 // pred_region
          %302 = dma.done %s295, 256
        $region56: #{tpu_custom_call.1} parent=47 // pred_fallthru
          _
        %s303 = sand.u32 %s36, 1
        %s304 = scalar_lea.sflag [#allocation4], %s303
        %s305 = sand.u32 %s36, 1
        %s306 = smul.addr %s305, 16
        %s307 = scalar_lea.vmem [#allocation3], %s306
        %p308 = pneg %p49
        %p309 = pneg %p46
        %s310 = sand.u32 %s62, 1
        %s311 = scalar_lea.sflag [#allocation7], %s310
        %s312 = sand.u32 %s62, 1
        %s313 = smul.addr %s312, 16
        %s314 = scalar_lea.vmem [#allocation6], %s313
        %p315 = pneg %p75
        %p316 = pneg %p72
        %p317 = pneg %p96
        %p318 = pneg %p93
        %p319 = pneg %p117
        %p320 = pneg %p114
        %p321 = pneg %p138
        %p322 = pneg %p135
        %p323 = pneg %p159
        %p324 = pneg %p156
        %p325 = pneg %p180
        %p326 = pneg %p177
        %p327 = pneg %p206
        %p328 = pneg %p203
        %s329 = sand.u32 %s193, 1
        %s330 = scalar_lea.sflag [#allocation5], %s329
        %s331 = sand.u32 %s193, 1
        %s332 = smul.addr %s331, 16
        %s333 = scalar_lea.vmem [#allocation8], %s332
        %v335 = vld [vmem:[%s289] sm:$0xff]
        %v336 = vld [vmem:[%s289 + $0x8] sm:$0xff]
        %338 = vrot.lane.b32.xlu0 %v335, 112
        %v339 = vpop.permute.xlu0 %338
        %341 = vrot.lane.b32.xlu0 %v335, 96
        %v342 = vpop.permute.xlu0 %341
        %344 = vrot.lane.b32.xlu0 %v335, 80
        %v345 = vpop.permute.xlu0 %344
        %347 = vrot.lane.b32.xlu0 %v335, 64
        %v348 = vpop.permute.xlu0 %347
        %350 = vrot.lane.b32.xlu0 %v335, 48
        %v351 = vpop.permute.xlu0 %350
        %353 = vrot.lane.b32.xlu0 %v335, 32
        %v354 = vpop.permute.xlu0 %353
        %356 = vrot.lane.b32.xlu0 %v335, 16
        %v357 = vpop.permute.xlu0 %356
        %360 = vrot.lane.b32.xlu0 %v336, 112
        %v361 = vpop.permute.xlu0 %360
        %363 = vrot.lane.b32.xlu0 %v336, 96
        %v364 = vpop.permute.xlu0 %363
        %366 = vrot.lane.b32.xlu0 %v336, 80
        %v367 = vpop.permute.xlu0 %366
        %369 = vrot.lane.b32.xlu0 %v336, 64
        %v370 = vpop.permute.xlu0 %369
        %372 = vrot.lane.b32.xlu0 %v336, 48
        %v373 = vpop.permute.xlu0 %372
        %375 = vrot.lane.b32.xlu0 %v336, 32
        %v376 = vpop.permute.xlu0 %375
        %378 = vrot.lane.b32.xlu0 %v336, 16
        %v379 = vpop.permute.xlu0 %378
        %v381 = vcombine.low %v335, %v342
        %v382 = vcombine.high %v335, %v342
        %v384 = vunpack.c.l.s4 1983009808
        %v385 = vunpack.c.0.s8 %v384
        %v386 = vlaneseq
        %v387 = vshrl.u32 %v386, 7
        %v388 = vsub.s32 %v385, %v387
        %v389 = vrot.slane %v381, %v388
        %v391 = vunpack.c.l.s4 1983009808
        %v392 = vunpack.c.0.s8 %v391
        %v393 = vlaneseq
        %v394 = vshrl.u32 %v393, 7
        %v395 = vsub.s32 %v392, %v394
        %v396 = vrot.slane %v382, %v395
        %v397 = vcombine.low %v339, %v345
        %v398 = vcombine.high %v339, %v345
        %v400 = vunpack.c.l.s4 1983009808
        %v401 = vunpack.c.0.s8 %v400
        %v402 = vlaneseq
        %v403 = vshrl.u32 %v402, 7
        %v404 = vsub.s32 %v401, %v403
        %v405 = vrot.slane %v397, %v404
        %v407 = vunpack.c.l.s4 1983009808
        %v408 = vunpack.c.0.s8 %v407
        %v409 = vlaneseq
        %v410 = vshrl.u32 %v409, 7
        %v411 = vsub.s32 %v408, %v410
        %v412 = vrot.slane %v398, %v411
        %v413 = vcombine.low %v348, %v354
        %v414 = vcombine.high %v348, %v354
        %v416 = vunpack.c.l.s4 1983009808
        %v417 = vunpack.c.0.s8 %v416
        %v418 = vlaneseq
        %v419 = vshrl.u32 %v418, 7
        %v420 = vsub.s32 %v417, %v419
        %v421 = vrot.slane %v413, %v420
        %v423 = vunpack.c.l.s4 1983009808
        %v424 = vunpack.c.0.s8 %v423
        %v425 = vlaneseq
        %v426 = vshrl.u32 %v425, 7
        %v427 = vsub.s32 %v424, %v426
        %v428 = vrot.slane %v414, %v427
        %v429 = vcombine.low %v351, %v357
        %v430 = vcombine.high %v351, %v357
        %v432 = vunpack.c.l.s4 1983009808
        %v433 = vunpack.c.0.s8 %v432
        %v434 = vlaneseq
        %v435 = vshrl.u32 %v434, 7
        %v436 = vsub.s32 %v433, %v435
        %v437 = vrot.slane %v429, %v436
        %v439 = vunpack.c.l.s4 1983009808
        %v440 = vunpack.c.0.s8 %v439
        %v441 = vlaneseq
        %v442 = vshrl.u32 %v441, 7
        %v443 = vsub.s32 %v440, %v442
        %v444 = vrot.slane %v430, %v443
        %v445 = vcombine.low %v389, %v405
        %v446 = vcombine.high %v389, %v405
        %v448 = vunpack.c.l.s4 1934713408
        %v449 = vunpack.c.0.s8 %v448
        %v450 = vlaneseq
        %v451 = vshrl.u32 %v450, 7
        %v452 = vsub.s32 %v449, %v451
        %v453 = vrot.slane %v445, %v452
        %v455 = vunpack.c.l.s4 1934713408
        %v456 = vunpack.c.0.s8 %v455
        %v457 = vlaneseq
        %v458 = vshrl.u32 %v457, 7
        %v459 = vsub.s32 %v456, %v458
        %v460 = vrot.slane %v446, %v459
        %v461 = vcombine.low %v396, %v412
        %v462 = vcombine.high %v396, %v412
        %v464 = vunpack.c.l.s4 1934713408
        %v465 = vunpack.c.0.s8 %v464
        %v466 = vlaneseq
        %v467 = vshrl.u32 %v466, 7
        %v468 = vsub.s32 %v465, %v467
        %v469 = vrot.slane %v461, %v468
        %v471 = vunpack.c.l.s4 1934713408
        %v472 = vunpack.c.0.s8 %v471
        %v473 = vlaneseq
        %v474 = vshrl.u32 %v473, 7
        %v475 = vsub.s32 %v472, %v474
        %v476 = vrot.slane %v462, %v475
        %v477 = vcombine.low %v421, %v437
        %v478 = vcombine.high %v421, %v437
        %v480 = vunpack.c.l.s4 1934713408
        %v481 = vunpack.c.0.s8 %v480
        %v482 = vlaneseq
        %v483 = vshrl.u32 %v482, 7
        %v484 = vsub.s32 %v481, %v483
        %v485 = vrot.slane %v477, %v484
        %v487 = vunpack.c.l.s4 1934713408
        %v488 = vunpack.c.0.s8 %v487
        %v489 = vlaneseq
        %v490 = vshrl.u32 %v489, 7
        %v491 = vsub.s32 %v488, %v490
        %v492 = vrot.slane %v478, %v491
        %v493 = vcombine.low %v428, %v444
        %v494 = vcombine.high %v428, %v444
        %v496 = vunpack.c.l.s4 1934713408
        %v497 = vunpack.c.0.s8 %v496
        %v498 = vlaneseq
        %v499 = vshrl.u32 %v498, 7
        %v500 = vsub.s32 %v497, %v499
        %v501 = vrot.slane %v493, %v500
        %v503 = vunpack.c.l.s4 1934713408
        %v504 = vunpack.c.0.s8 %v503
        %v505 = vlaneseq
        %v506 = vshrl.u32 %v505, 7
        %v507 = vsub.s32 %v504, %v506
        %v508 = vrot.slane %v494, %v507
        %v509 = vcombine.low %v453, %v485
        %v510 = vcombine.high %v453, %v485
        %v511 = vcombine.low %v460, %v492
        %v512 = vcombine.high %v460, %v492
        %v513 = vcombine.low %v469, %v501
        %v514 = vcombine.high %v469, %v501
        %v515 = vcombine.low %v476, %v508
        %v516 = vcombine.high %v476, %v508
        %v517 = vcombine.low %v336, %v364
        %v518 = vcombine.high %v336, %v364
        %v520 = vunpack.c.l.s4 1983009808
        %v521 = vunpack.c.0.s8 %v520
        %v522 = vlaneseq
        %v523 = vshrl.u32 %v522, 7
        %v524 = vsub.s32 %v521, %v523
        %v525 = vrot.slane %v517, %v524
        %v527 = vunpack.c.l.s4 1983009808
        %v528 = vunpack.c.0.s8 %v527
        %v529 = vlaneseq
        %v530 = vshrl.u32 %v529, 7
        %v531 = vsub.s32 %v528, %v530
        %v532 = vrot.slane %v518, %v531
        %v533 = vcombine.low %v361, %v367
        %v534 = vcombine.high %v361, %v367
        %v536 = vunpack.c.l.s4 1983009808
        %v537 = vunpack.c.0.s8 %v536
        %v538 = vlaneseq
        %v539 = vshrl.u32 %v538, 7
        %v540 = vsub.s32 %v537, %v539
        %v541 = vrot.slane %v533, %v540
        %v543 = vunpack.c.l.s4 1983009808
        %v544 = vunpack.c.0.s8 %v543
        %v545 = vlaneseq
        %v546 = vshrl.u32 %v545, 7
        %v547 = vsub.s32 %v544, %v546
        %v548 = vrot.slane %v534, %v547
        %v549 = vcombine.low %v370, %v376
        %v550 = vcombine.high %v370, %v376
        %v552 = vunpack.c.l.s4 1983009808
        %v553 = vunpack.c.0.s8 %v552
        %v554 = vlaneseq
        %v555 = vshrl.u32 %v554, 7
        %v556 = vsub.s32 %v553, %v555
        %v557 = vrot.slane %v549, %v556
        %v559 = vunpack.c.l.s4 1983009808
        %v560 = vunpack.c.0.s8 %v559
        %v561 = vlaneseq
        %v562 = vshrl.u32 %v561, 7
        %v563 = vsub.s32 %v560, %v562
        %v564 = vrot.slane %v550, %v563
        %v565 = vcombine.low %v373, %v379
        %v566 = vcombine.high %v373, %v379
        %v568 = vunpack.c.l.s4 1983009808
        %v569 = vunpack.c.0.s8 %v568
        %v570 = vlaneseq
        %v571 = vshrl.u32 %v570, 7
        %v572 = vsub.s32 %v569, %v571
        %v573 = vrot.slane %v565, %v572
        %v575 = vunpack.c.l.s4 1983009808
        %v576 = vunpack.c.0.s8 %v575
        %v577 = vlaneseq
        %v578 = vshrl.u32 %v577, 7
        %v579 = vsub.s32 %v576, %v578
        %v580 = vrot.slane %v566, %v579
        %v581 = vcombine.low %v525, %v541
        %v582 = vcombine.high %v525, %v541
        %v584 = vunpack.c.l.s4 1934713408
        %v585 = vunpack.c.0.s8 %v584
        %v586 = vlaneseq
        %v587 = vshrl.u32 %v586, 7
        %v588 = vsub.s32 %v585, %v587
        %v589 = vrot.slane %v581, %v588
        %v591 = vunpack.c.l.s4 1934713408
        %v592 = vunpack.c.0.s8 %v591
        %v593 = vlaneseq
        %v594 = vshrl.u32 %v593, 7
        %v595 = vsub.s32 %v592, %v594
        %v596 = vrot.slane %v582, %v595
        %v597 = vcombine.low %v532, %v548
        %v598 = vcombine.high %v532, %v548
        %v600 = vunpack.c.l.s4 1934713408
        %v601 = vunpack.c.0.s8 %v600
        %v602 = vlaneseq
        %v603 = vshrl.u32 %v602, 7
        %v604 = vsub.s32 %v601, %v603
        %v605 = vrot.slane %v597, %v604
        %v607 = vunpack.c.l.s4 1934713408
        %v608 = vunpack.c.0.s8 %v607
        %v609 = vlaneseq
        %v610 = vshrl.u32 %v609, 7
        %v611 = vsub.s32 %v608, %v610
        %v612 = vrot.slane %v598, %v611
        %v613 = vcombine.low %v557, %v573
        %v614 = vcombine.high %v557, %v573
        %v616 = vunpack.c.l.s4 1934713408
        %v617 = vunpack.c.0.s8 %v616
        %v618 = vlaneseq
        %v619 = vshrl.u32 %v618, 7
        %v620 = vsub.s32 %v617, %v619
        %v621 = vrot.slane %v613, %v620
        %v623 = vunpack.c.l.s4 1934713408
        %v624 = vunpack.c.0.s8 %v623
        %v625 = vlaneseq
        %v626 = vshrl.u32 %v625, 7
        %v627 = vsub.s32 %v624, %v626
        %v628 = vrot.slane %v614, %v627
        %v629 = vcombine.low %v564, %v580
        %v630 = vcombine.high %v564, %v580
        %v632 = vunpack.c.l.s4 1934713408
        %v633 = vunpack.c.0.s8 %v632
        %v634 = vlaneseq
        %v635 = vshrl.u32 %v634, 7
        %v636 = vsub.s32 %v633, %v635
        %v637 = vrot.slane %v629, %v636
        %v639 = vunpack.c.l.s4 1934713408
        %v640 = vunpack.c.0.s8 %v639
        %v641 = vlaneseq
        %v642 = vshrl.u32 %v641, 7
        %v643 = vsub.s32 %v640, %v642
        %v644 = vrot.slane %v630, %v643
        %v645 = vcombine.low %v589, %v621
        %v646 = vcombine.high %v589, %v621
        %v647 = vcombine.low %v596, %v628
        %v648 = vcombine.high %v596, %v628
        %v649 = vcombine.low %v605, %v637
        %v650 = vcombine.high %v605, %v637
        %v651 = vcombine.low %v612, %v644
        %v652 = vcombine.high %v612, %v644
        %653 = vxpose.xlu0.b32.start [1/16] %v509, 128
        %654 = vxpose.xlu0.b32.cont [2/16] %v645, 128
        %655 = vxpose.xlu0.b32.cont [3/16] 0.0, 128
        %656 = vxpose.xlu0.b32.cont [4/16] 0.0, 128
        %657 = vxpose.xlu0.b32.cont [5/16] 0.0, 128
        %658 = vxpose.xlu0.b32.cont [6/16] 0.0, 128
        %659 = vxpose.xlu0.b32.cont [7/16] 0.0, 128
        %660 = vxpose.xlu0.b32.cont [8/16] 0.0, 128
        %661 = vxpose.xlu0.b32.cont [9/16] 0.0, 128
        %662 = vxpose.xlu0.b32.cont [10/16] 0.0, 128
        %663 = vxpose.xlu0.b32.cont [11/16] 0.0, 128
        %664 = vxpose.xlu0.b32.cont [12/16] 0.0, 128
        %665 = vxpose.xlu0.b32.cont [13/16] 0.0, 128
        %666 = vxpose.xlu0.b32.cont [14/16] 0.0, 128
        %667 = vxpose.xlu0.b32.cont [15/16] 0.0, 128
        %668 = vxpose.xlu0.b32.end [16/16] 0.0, 128
        %v669 = vpop.trf.xlu0
        %v670 = vpop.trf.xlu0
        %v671 = vpop.trf.xlu0
        %v672 = vpop.trf.xlu0
        %v673 = vpop.trf.xlu0
        %v674 = vpop.trf.xlu0
        %v675 = vpop.trf.xlu0
        %v676 = vpop.trf.xlu0
        %v677 = vpop.trf.xlu0
        %v678 = vpop.trf.xlu0
        %v679 = vpop.trf.xlu0
        %v680 = vpop.trf.xlu0
        %v681 = vpop.trf.xlu0
        %v682 = vpop.trf.xlu0
        %v683 = vpop.trf.xlu0
        %v684 = vpop.trf.xlu0
        %685 = vxpose.xlu0.b32.start [1/16] %v510, 128
        %686 = vxpose.xlu0.b32.cont [2/16] %v646, 128
        %687 = vxpose.xlu0.b32.cont [3/16] 0.0, 128
        %688 = vxpose.xlu0.b32.cont [4/16] 0.0, 128
        %689 = vxpose.xlu0.b32.cont [5/16] 0.0, 128
        %690 = vxpose.xlu0.b32.cont [6/16] 0.0, 128
        %691 = vxpose.xlu0.b32.cont [7/16] 0.0, 128
        %692 = vxpose.xlu0.b32.cont [8/16] 0.0, 128
        %693 = vxpose.xlu0.b32.cont [9/16] 0.0, 128
        %694 = vxpose.xlu0.b32.cont [10/16] 0.0, 128
        %695 = vxpose.xlu0.b32.cont [11/16] 0.0, 128
        %696 = vxpose.xlu0.b32.cont [12/16] 0.0, 128
        %697 = vxpose.xlu0.b32.cont [13/16] 0.0, 128
        %698 = vxpose.xlu0.b32.cont [14/16] 0.0, 128
        %699 = vxpose.xlu0.b32.cont [15/16] 0.0, 128
        %700 = vxpose.xlu0.b32.end [16/16] 0.0, 128
        %v701 = vpop.trf.xlu0
        %v702 = vpop.trf.xlu0
        %v703 = vpop.trf.xlu0
        %v704 = vpop.trf.xlu0
        %v705 = vpop.trf.xlu0
        %v706 = vpop.trf.xlu0
        %v707 = vpop.trf.xlu0
        %v708 = vpop.trf.xlu0
        %v709 = vpop.trf.xlu0
        %v710 = vpop.trf.xlu0
        %v711 = vpop.trf.xlu0
        %v712 = vpop.trf.xlu0
        %v713 = vpop.trf.xlu0
        %v714 = vpop.trf.xlu0
        %v715 = vpop.trf.xlu0
        %v716 = vpop.trf.xlu0
        %717 = vxpose.xlu0.b32.start [1/16] %v511, 128
        %718 = vxpose.xlu0.b32.cont [2/16] %v647, 128
        %719 = vxpose.xlu0.b32.cont [3/16] 0.0, 128
        %720 = vxpose.xlu0.b32.cont [4/16] 0.0, 128
        %721 = vxpose.xlu0.b32.cont [5/16] 0.0, 128
        %722 = vxpose.xlu0.b32.cont [6/16] 0.0, 128
        %723 = vxpose.xlu0.b32.cont [7/16] 0.0, 128
        %724 = vxpose.xlu0.b32.cont [8/16] 0.0, 128
        %725 = vxpose.xlu0.b32.cont [9/16] 0.0, 128
        %726 = vxpose.xlu0.b32.cont [10/16] 0.0, 128
        %727 = vxpose.xlu0.b32.cont [11/16] 0.0, 128
        %728 = vxpose.xlu0.b32.cont [12/16] 0.0, 128
        %729 = vxpose.xlu0.b32.cont [13/16] 0.0, 128
        %730 = vxpose.xlu0.b32.cont [14/16] 0.0, 128
        %731 = vxpose.xlu0.b32.cont [15/16] 0.0, 128
        %732 = vxpose.xlu0.b32.end [16/16] 0.0, 128
        %v733 = vpop.trf.xlu0
        %v734 = vpop.trf.xlu0
        %v735 = vpop.trf.xlu0
        %v736 = vpop.trf.xlu0
        %v737 = vpop.trf.xlu0
        %v738 = vpop.trf.xlu0
        %v739 = vpop.trf.xlu0
        %v740 = vpop.trf.xlu0
        %v741 = vpop.trf.xlu0
        %v742 = vpop.trf.xlu0
        %v743 = vpop.trf.xlu0
        %v744 = vpop.trf.xlu0
        %v745 = vpop.trf.xlu0
        %v746 = vpop.trf.xlu0
        %v747 = vpop.trf.xlu0
        %v748 = vpop.trf.xlu0
        %749 = vxpose.xlu0.b32.start [1/16] %v512, 128
        %750 = vxpose.xlu0.b32.cont [2/16] %v648, 128
        %751 = vxpose.xlu0.b32.cont [3/16] 0.0, 128
        %752 = vxpose.xlu0.b32.cont [4/16] 0.0, 128
        %753 = vxpose.xlu0.b32.cont [5/16] 0.0, 128
        %754 = vxpose.xlu0.b32.cont [6/16] 0.0, 128
        %755 = vxpose.xlu0.b32.cont [7/16] 0.0, 128
        %756 = vxpose.xlu0.b32.cont [8/16] 0.0, 128
        %757 = vxpose.xlu0.b32.cont [9/16] 0.0, 128
        %758 = vxpose.xlu0.b32.cont [10/16] 0.0, 128
        %759 = vxpose.xlu0.b32.cont [11/16] 0.0, 128
        %760 = vxpose.xlu0.b32.cont [12/16] 0.0, 128
        %761 = vxpose.xlu0.b32.cont [13/16] 0.0, 128
        %762 = vxpose.xlu0.b32.cont [14/16] 0.0, 128
        %763 = vxpose.xlu0.b32.cont [15/16] 0.0, 128
        %764 = vxpose.xlu0.b32.end [16/16] 0.0, 128
        %v765 = vpop.trf.xlu0
        %v766 = vpop.trf.xlu0
        %v767 = vpop.trf.xlu0
        %v768 = vpop.trf.xlu0
        %v769 = vpop.trf.xlu0
        %v770 = vpop.trf.xlu0
        %v771 = vpop.trf.xlu0
        %v772 = vpop.trf.xlu0
        %v773 = vpop.trf.xlu0
        %v774 = vpop.trf.xlu0
        %v775 = vpop.trf.xlu0
        %v776 = vpop.trf.xlu0
        %v777 = vpop.trf.xlu0
        %v778 = vpop.trf.xlu0
        %v779 = vpop.trf.xlu0
        %v780 = vpop.trf.xlu0
        %781 = vxpose.xlu0.b32.start [1/16] %v513, 128
        %782 = vxpose.xlu0.b32.cont [2/16] %v649, 128
        %783 = vxpose.xlu0.b32.cont [3/16] 0.0, 128
        %784 = vxpose.xlu0.b32.cont [4/16] 0.0, 128
        %785 = vxpose.xlu0.b32.cont [5/16] 0.0, 128
        %786 = vxpose.xlu0.b32.cont [6/16] 0.0, 128
        %787 = vxpose.xlu0.b32.cont [7/16] 0.0, 128
        %788 = vxpose.xlu0.b32.cont [8/16] 0.0, 128
        %789 = vxpose.xlu0.b32.cont [9/16] 0.0, 128
        %790 = vxpose.xlu0.b32.cont [10/16] 0.0, 128
        %791 = vxpose.xlu0.b32.cont [11/16] 0.0, 128
        %792 = vxpose.xlu0.b32.cont [12/16] 0.0, 128
        %793 = vxpose.xlu0.b32.cont [13/16] 0.0, 128
        %794 = vxpose.xlu0.b32.cont [14/16] 0.0, 128
        %795 = vxpose.xlu0.b32.cont [15/16] 0.0, 128
        %796 = vxpose.xlu0.b32.end [16/16] 0.0, 128
        %v797 = vpop.trf.xlu0
        %v798 = vpop.trf.xlu0
        %v799 = vpop.trf.xlu0
        %v800 = vpop.trf.xlu0
        %v801 = vpop.trf.xlu0
        %v802 = vpop.trf.xlu0
        %v803 = vpop.trf.xlu0
        %v804 = vpop.trf.xlu0
        %v805 = vpop.trf.xlu0
        %v806 = vpop.trf.xlu0
        %v807 = vpop.trf.xlu0
        %v808 = vpop.trf.xlu0
        %v809 = vpop.trf.xlu0
        %v810 = vpop.trf.xlu0
        %v811 = vpop.trf.xlu0
        %v812 = vpop.trf.xlu0
        %813 = vxpose.xlu0.b32.start [1/16] %v514, 128
        %814 = vxpose.xlu0.b32.cont [2/16] %v650, 128
        %815 = vxpose.xlu0.b32.cont [3/16] 0.0, 128
        %816 = vxpose.xlu0.b32.cont [4/16] 0.0, 128
        %817 = vxpose.xlu0.b32.cont [5/16] 0.0, 128
        %818 = vxpose.xlu0.b32.cont [6/16] 0.0, 128
        %819 = vxpose.xlu0.b32.cont [7/16] 0.0, 128
        %820 = vxpose.xlu0.b32.cont [8/16] 0.0, 128
        %821 = vxpose.xlu0.b32.cont [9/16] 0.0, 128
        %822 = vxpose.xlu0.b32.cont [10/16] 0.0, 128
        %823 = vxpose.xlu0.b32.cont [11/16] 0.0, 128
        %824 = vxpose.xlu0.b32.cont [12/16] 0.0, 128
        %825 = vxpose.xlu0.b32.cont [13/16] 0.0, 128
        %826 = vxpose.xlu0.b32.cont [14/16] 0.0, 128
        %827 = vxpose.xlu0.b32.cont [15/16] 0.0, 128
        %828 = vxpose.xlu0.b32.end [16/16] 0.0, 128
        %v829 = vpop.trf.xlu0
        %v830 = vpop.trf.xlu0
        %v831 = vpop.trf.xlu0
        %v832 = vpop.trf.xlu0
        %v833 = vpop.trf.xlu0
        %v834 = vpop.trf.xlu0
        %v835 = vpop.trf.xlu0
        %v836 = vpop.trf.xlu0
        %v837 = vpop.trf.xlu0
        %v838 = vpop.trf.xlu0
        %v839 = vpop.trf.xlu0
        %v840 = vpop.trf.xlu0
        %v841 = vpop.trf.xlu0
        %v842 = vpop.trf.xlu0
        %v843 = vpop.trf.xlu0
        %v844 = vpop.trf.xlu0
        %845 = vxpose.xlu0.b32.start [1/16] %v515, 128
        %846 = vxpose.xlu0.b32.cont [2/16] %v651, 128
        %847 = vxpose.xlu0.b32.cont [3/16] 0.0, 128
        %848 = vxpose.xlu0.b32.cont [4/16] 0.0, 128
        %849 = vxpose.xlu0.b32.cont [5/16] 0.0, 128
        %850 = vxpose.xlu0.b32.cont [6/16] 0.0, 128
        %851 = vxpose.xlu0.b32.cont [7/16] 0.0, 128
        %852 = vxpose.xlu0.b32.cont [8/16] 0.0, 128
        %853 = vxpose.xlu0.b32.cont [9/16] 0.0, 128
        %854 = vxpose.xlu0.b32.cont [10/16] 0.0, 128
        %855 = vxpose.xlu0.b32.cont [11/16] 0.0, 128
        %856 = vxpose.xlu0.b32.cont [12/16] 0.0, 128
        %857 = vxpose.xlu0.b32.cont [13/16] 0.0, 128
        %858 = vxpose.xlu0.b32.cont [14/16] 0.0, 128
        %859 = vxpose.xlu0.b32.cont [15/16] 0.0, 128
        %860 = vxpose.xlu0.b32.end [16/16] 0.0, 128
        %v861 = vpop.trf.xlu0
        %v862 = vpop.trf.xlu0
        %v863 = vpop.trf.xlu0
        %v864 = vpop.trf.xlu0
        %v865 = vpop.trf.xlu0
        %v866 = vpop.trf.xlu0
        %v867 = vpop.trf.xlu0
        %v868 = vpop.trf.xlu0
        %v869 = vpop.trf.xlu0
        %v870 = vpop.trf.xlu0
        %v871 = vpop.trf.xlu0
        %v872 = vpop.trf.xlu0
        %v873 = vpop.trf.xlu0
        %v874 = vpop.trf.xlu0
        %v875 = vpop.trf.xlu0
        %v876 = vpop.trf.xlu0
        %877 = vxpose.xlu0.b32.start [1/16] %v516, 128
        %878 = vxpose.xlu0.b32.cont [2/16] %v652, 128
        %879 = vxpose.xlu0.b32.cont [3/16] 0.0, 128
        %880 = vxpose.xlu0.b32.cont [4/16] 0.0, 128
        %881 = vxpose.xlu0.b32.cont [5/16] 0.0, 128
        %882 = vxpose.xlu0.b32.cont [6/16] 0.0, 128
        %883 = vxpose.xlu0.b32.cont [7/16] 0.0, 128
        %884 = vxpose.xlu0.b32.cont [8/16] 0.0, 128
        %885 = vxpose.xlu0.b32.cont [9/16] 0.0, 128
        %886 = vxpose.xlu0.b32.cont [10/16] 0.0, 128
        %887 = vxpose.xlu0.b32.cont [11/16] 0.0, 128
        %888 = vxpose.xlu0.b32.cont [12/16] 0.0, 128
        %889 = vxpose.xlu0.b32.cont [13/16] 0.0, 128
        %890 = vxpose.xlu0.b32.cont [14/16] 0.0, 128
        %891 = vxpose.xlu0.b32.cont [15/16] 0.0, 128
        %892 = vxpose.xlu0.b32.end [16/16] 0.0, 128
        %v893 = vpop.trf.xlu0
        %v894 = vpop.trf.xlu0
        %v895 = vpop.trf.xlu0
        %v896 = vpop.trf.xlu0
        %v897 = vpop.trf.xlu0
        %v898 = vpop.trf.xlu0
        %v899 = vpop.trf.xlu0
        %v900 = vpop.trf.xlu0
        %v901 = vpop.trf.xlu0
        %v902 = vpop.trf.xlu0
        %v903 = vpop.trf.xlu0
        %v904 = vpop.trf.xlu0
        %v905 = vpop.trf.xlu0
        %v906 = vpop.trf.xlu0
        %v907 = vpop.trf.xlu0
        %v908 = vpop.trf.xlu0
        %v909 = vpack.c.bf16 %v670, %v669
        %v910 = vpack.c.bf16 %v702, %v701
        %v911 = vpack.c.bf16 %v734, %v733
        %v912 = vpack.c.bf16 %v766, %v765
        %v913 = vpack.c.bf16 %v798, %v797
        %v914 = vpack.c.bf16 %v830, %v829
        %v915 = vpack.c.bf16 %v862, %v861
        %v916 = vpack.c.bf16 %v894, %v893
        %v917 = vld [vmem:[%s2] sm:$0xf]
        %v918 = vld [vmem:[%s2 + $0x4] sm:$0xf]
        %v919 = vld [vmem:[%s3] sm:$0x1]
        %v921 = vlaneseq
        %v922 = vshrl.u32 %v921, 7
        %v923 = vsub.s32 0, %v922
        %v924 = vrot.slane %v919, %v923
        %v928 = vunpack.c.l.b16 %v917
        %v929 = vunpack.c.l.b16 %v918
        %v930 = vpack.c.b16 %v929, %v928
        %vm932 = vcmask 130048
        %v934 = vsel %vm932, %v909, 0
        %v937 = vsel %vm932, %v910, 0
        %v940 = vsel %vm932, %v911, 0
        %v943 = vsel %vm932, %v912, 0
        %v946 = vsel %vm932, %v913, 0
        %v949 = vsel %vm932, %v914, 0
        %v952 = vsel %vm932, %v915, 0
        %v955 = vsel %vm932, %v916, 0
        %957 = vmatprep.subr.bf16.mxu0 0
        %958 = vmatpush1.bf16.msra.mxu0 %v930
        %959 = vmatprep.subr.bf16.mxu0 0
        %960 = vmatpush1.bf16.msra.mxu0 0
        %961 = vmatprep.subr.bf16.mxu0 0
        %962 = vmatpush1.bf16.msra.mxu0 0
        %963 = vmatprep.subr.bf16.mxu0 0
        %964 = vmatpush1.bf16.msra.mxu0 0
        %965 = vmatprep.subr.bf16.mxu0 0
        %966 = vmatpush1.bf16.msra.mxu0 0
        %967 = vmatprep.subr.bf16.mxu0 0
        %968 = vmatpush1.bf16.msra.mxu0 0
        %969 = vmatprep.subr.bf16.mxu0 0
        %970 = vmatpush1.bf16.msra.mxu0 0
        %971 = vmatprep.subr.bf16.mxu0 0
        %972 = vmatpush1.bf16.msra.mxu0 0
        %973 = vmatprep.subr.bf16.mxu0 0
        %974 = vmatpush1.bf16.msra.mxu0 0
        %975 = vmatprep.subr.bf16.mxu0 0
        %976 = vmatpush1.bf16.msra.mxu0 0
        %977 = vmatprep.subr.bf16.mxu0 0
        %978 = vmatpush1.bf16.msra.mxu0 0
        %979 = vmatprep.subr.bf16.mxu0 0
        %980 = vmatpush1.bf16.msra.mxu0 0
        %981 = vmatprep.subr.bf16.mxu0 0
        %982 = vmatpush1.bf16.msra.mxu0 0
        %983 = vmatprep.subr.bf16.mxu0 0
        %984 = vmatpush1.bf16.msra.mxu0 0
        %985 = vmatprep.subr.bf16.mxu0 0
        %986 = vmatpush1.bf16.msra.mxu0 0
        %987 = vmatprep.subr.bf16.mxu0 0
        %988 = vmatpush1.bf16.msra.mxu0 0
        %989 = vmatprep.mubr.bf16.mxu0 0
        %990 = vmatmul.mubr.bf16.gmra.mrb[0].mxu0 %v934
        %v991 = vpop.f32.mrb[0].mxu0
        %v992 = vadd.f32 %v924, %v991
        %v993 = vpop.f32.mrb[0].mxu0
        %v994 = vpop.f32.mrb[0].mxu0
        %v995 = vadd.f32 %v924, %v994
        %v996 = vpop.f32.mrb[0].mxu0
        %997 = vmatprep.mubr.bf16.mxu0 0
        %998 = vmatmul.mubr.bf16.gmra.mrb[0].mxu0 %v937
        %v999 = vpop.f32.mrb[0].mxu0
        %v1000 = vadd.f32 %v924, %v999
        %v1001 = vpop.f32.mrb[0].mxu0
        %v1002 = vpop.f32.mrb[0].mxu0
        %v1003 = vadd.f32 %v924, %v1002
        %v1004 = vpop.f32.mrb[0].mxu0
        %1005 = vmatprep.mubr.bf16.mxu0 0
        %1006 = vmatmul.mubr.bf16.gmra.mrb[0].mxu0 %v940
        %v1007 = vpop.f32.mrb[0].mxu0
        %v1008 = vadd.f32 %v924, %v1007
        %v1009 = vpop.f32.mrb[0].mxu0
        %v1010 = vpop.f32.mrb[0].mxu0
        %v1011 = vadd.f32 %v924, %v1010
        %v1012 = vpop.f32.mrb[0].mxu0
        %1013 = vmatprep.mubr.bf16.mxu0 0
        %1014 = vmatmul.mubr.bf16.gmra.mrb[0].mxu0 %v943
        %v1015 = vpop.f32.mrb[0].mxu0
        %v1016 = vadd.f32 %v924, %v1015
        %v1017 = vpop.f32.mrb[0].mxu0
        %v1018 = vpop.f32.mrb[0].mxu0
        %v1019 = vadd.f32 %v924, %v1018
        %v1020 = vpop.f32.mrb[0].mxu0
        %1021 = vmatprep.mubr.bf16.mxu0 0
        %1022 = vmatmul.mubr.bf16.gmra.mrb[0].mxu0 %v946
        %v1023 = vpop.f32.mrb[0].mxu0
        %v1024 = vadd.f32 %v924, %v1023
        %v1025 = vpop.f32.mrb[0].mxu0
        %v1026 = vpop.f32.mrb[0].mxu0
        %v1027 = vadd.f32 %v924, %v1026
        %v1028 = vpop.f32.mrb[0].mxu0
        %1029 = vmatprep.mubr.bf16.mxu0 0
        %1030 = vmatmul.mubr.bf16.gmra.mrb[0].mxu0 %v949
        %v1031 = vpop.f32.mrb[0].mxu0
        %v1032 = vadd.f32 %v924, %v1031
        %v1033 = vpop.f32.mrb[0].mxu0
        %v1034 = vpop.f32.mrb[0].mxu0
        %v1035 = vadd.f32 %v924, %v1034
        %v1036 = vpop.f32.mrb[0].mxu0
        %1037 = vmatprep.mubr.bf16.mxu0 0
        %1038 = vmatmul.mubr.bf16.gmra.mrb[0].mxu0 %v952
        %v1039 = vpop.f32.mrb[0].mxu0
        %v1040 = vadd.f32 %v924, %v1039
        %v1041 = vpop.f32.mrb[0].mxu0
        %v1042 = vpop.f32.mrb[0].mxu0
        %v1043 = vadd.f32 %v924, %v1042
        %v1044 = vpop.f32.mrb[0].mxu0
        %1045 = vmatprep.mubr.bf16.mxu0 0
        %1046 = vmatmul.mubr.bf16.gmra.mrb[0].mxu0 %v955
        %v1047 = vpop.f32.mrb[0].mxu0
        %v1048 = vadd.f32 %v924, %v1047
        %v1049 = vpop.f32.mrb[0].mxu0
        %v1050 = vpop.f32.mrb[0].mxu0
        %v1051 = vadd.f32 %v924, %v1050
        %v1052 = vpop.f32.mrb[0].mxu0
        %1053 = vdwg.mxu0
        %v1054 = vmax.f32 %v992, 0.0
        %v1055 = vmax.f32 %v995, 0.0
        %v1056 = vmax.f32 %v1000, 0.0
        %v1057 = vmax.f32 %v1003, 0.0
        %v1058 = vmax.f32 %v1008, 0.0
        %v1059 = vmax.f32 %v1011, 0.0
        %v1060 = vmax.f32 %v1016, 0.0
        %v1061 = vmax.f32 %v1019, 0.0
        %v1062 = vmax.f32 %v1024, 0.0
        %v1063 = vmax.f32 %v1027, 0.0
        %v1064 = vmax.f32 %v1032, 0.0
        %v1065 = vmax.f32 %v1035, 0.0
        %v1066 = vmax.f32 %v1040, 0.0
        %v1067 = vmax.f32 %v1043, 0.0
        %v1068 = vmax.f32 %v1048, 0.0
        %v1069 = vmax.f32 %v1051, 0.0
        %v1070 = vpack.c.bf16 %v1055, %v1054
        %v1071 = vpack.c.bf16 %v1057, %v1056
        %v1072 = vpack.c.bf16 %v1059, %v1058
        %v1073 = vpack.c.bf16 %v1061, %v1060
        %v1074 = vpack.c.bf16 %v1063, %v1062
        %v1075 = vpack.c.bf16 %v1065, %v1064
        %v1076 = vpack.c.bf16 %v1067, %v1066
        %v1077 = vpack.c.bf16 %v1069, %v1068
        %1079 = vrot.lane.b32.xlu0 %v1070, 112
        %v1080 = vpop.permute.xlu0 %1079
        %1081 = vrot.lane.b32.xlu0 %v1070, 108
        %v1082 = vpop.permute.xlu0 %1081
        %vm1083 = vcmask 31744
        %v1085 = vsel %vm1083, %v1080, 0
        %v1088 = vsel %vm1083, %v1082, 0
        %1090 = vmatprep.subr.bf16.mxu0 0
        %1091 = vmatpush1.bf16.xpose.msra.mxu0 %v1088
        %1092 = vmatprep.subr.bf16.mxu0 0
        %1093 = vmatpush1.bf16.xpose.msra.mxu0 0
        %1094 = vmatprep.subr.bf16.mxu0 0
        %1095 = vmatpush1.bf16.xpose.msra.mxu0 0
        %1096 = vmatprep.subr.bf16.mxu0 0
        %1097 = vmatpush1.bf16.xpose.msra.mxu0 0
        %1098 = vmatprep.subr.bf16.mxu0 0
        %1099 = vmatpush1.bf16.xpose.msra.mxu0 0
        %1100 = vmatprep.subr.bf16.mxu0 0
        %1101 = vmatpush1.bf16.xpose.msra.mxu0 0
        %1102 = vmatprep.subr.bf16.mxu0 0
        %1103 = vmatpush1.bf16.xpose.msra.mxu0 0
        %1104 = vmatprep.subr.bf16.mxu0 0
        %1105 = vmatpush1.bf16.xpose.msra.mxu0 0
        %1106 = vmatprep.subr.bf16.mxu0 0
        %1107 = vmatpush1.bf16.xpose.msra.mxu0 0
        %1108 = vmatprep.subr.bf16.mxu0 0
        %1109 = vmatpush1.bf16.xpose.msra.mxu0 0
        %1110 = vmatprep.subr.bf16.mxu0 0
        %1111 = vmatpush1.bf16.xpose.msra.mxu0 0
        %1112 = vmatprep.subr.bf16.mxu0 0
        %1113 = vmatpush1.bf16.xpose.msra.mxu0 0
        %1114 = vmatprep.subr.bf16.mxu0 0
        %1115 = vmatpush1.bf16.xpose.msra.mxu0 0
        %1116 = vmatprep.subr.bf16.mxu0 0
        %1117 = vmatpush1.bf16.xpose.msra.mxu0 0
        %1118 = vmatprep.subr.bf16.mxu0 0
        %1119 = vmatpush1.bf16.xpose.msra.mxu0 0
        %1120 = vmatprep.subr.bf16.mxu0 0
        %1121 = vmatpush1.bf16.xpose.msra.mxu0 0
        %1122 = vmatprep.mubr.bf16.mxu0 0
        %1123 = vmatmul.mubr.bf16.gmra.mrb[0].mxu0 %v1085
        %v1124 = vpop.f32.mrb[0].mxu0
        %v1125 = vadd.f32 0.0, %v1124
        %v1126 = vpop.f32.mrb[0].mxu0
        %v1127 = vpop.f32.mrb[0].mxu0
        %v1128 = vadd.f32 0.0, %v1127
        %v1129 = vpop.f32.mrb[0].mxu0
        %1130 = vdwg.mxu0
        %1132 = vrot.lane.b32.xlu0 %v1071, 112
        %v1133 = vpop.permute.xlu0 %1132
        %1134 = vrot.lane.b32.xlu0 %v1071, 108
        %v1135 = vpop.permute.xlu0 %1134
        %v1137 = vsel %vm1083, %v1133, 0
        %v1140 = vsel %vm1083, %v1135, 0
        %1142 = vmatprep.subr.bf16.mxu0 0
        %1143 = vmatpush1.bf16.xpose.msra.mxu0 %v1140
        %1144 = vmatprep.subr.bf16.mxu0 0
        %1145 = vmatpush1.bf16.xpose.msra.mxu0 0
        %1146 = vmatprep.subr.bf16.mxu0 0
        %1147 = vmatpush1.bf16.xpose.msra.mxu0 0
        %1148 = vmatprep.subr.bf16.mxu0 0
        %1149 = vmatpush1.bf16.xpose.msra.mxu0 0
        %1150 = vmatprep.subr.bf16.mxu0 0
        %1151 = vmatpush1.bf16.xpose.msra.mxu0 0
        %1152 = vmatprep.subr.bf16.mxu0 0
        %1153 = vmatpush1.bf16.xpose.msra.mxu0 0
        %1154 = vmatprep.subr.bf16.mxu0 0
        %1155 = vmatpush1.bf16.xpose.msra.mxu0 0
        %1156 = vmatprep.subr.bf16.mxu0 0
        %1157 = vmatpush1.bf16.xpose.msra.mxu0 0
        %1158 = vmatprep.subr.bf16.mxu0 0
        %1159 = vmatpush1.bf16.xpose.msra.mxu0 0
        %1160 = vmatprep.subr.bf16.mxu0 0
        %1161 = vmatpush1.bf16.xpose.msra.mxu0 0
        %1162 = vmatprep.subr.bf16.mxu0 0
        %1163 = vmatpush1.bf16.xpose.msra.mxu0 0
        %1164 = vmatprep.subr.bf16.mxu0 0
        %1165 = vmatpush1.bf16.xpose.msra.mxu0 0
        %1166 = vmatprep.subr.bf16.mxu0 0
        %1167 = vmatpush1.bf16.xpose.msra.mxu0 0
        %1168 = vmatprep.subr.bf16.mxu0 0
        %1169 = vmatpush1.bf16.xpose.msra.mxu0 0
        %1170 = vmatprep.subr.bf16.mxu0 0
        %1171 = vmatpush1.bf16.xpose.msra.mxu0 0
        %1172 = vmatprep.subr.bf16.mxu0 0
        %1173 = vmatpush1.bf16.xpose.msra.mxu0 0
        %1174 = vmatprep.mubr.bf16.mxu0 0
        %1175 = vmatmul.mubr.bf16.gmra.mrb[0].mxu0 %v1137
        %v1176 = vpop.f32.mrb[0].mxu0
        %v1177 = vadd.f32 0.0, %v1176
        %v1178 = vpop.f32.mrb[0].mxu0
        %v1179 = vpop.f32.mrb[0].mxu0
        %v1180 = vadd.f32 0.0, %v1179
        %v1181 = vpop.f32.mrb[0].mxu0
        %1182 = vdwg.mxu0
        %1184 = vrot.lane.b32.xlu0 %v1072, 112
        %v1185 = vpop.permute.xlu0 %1184
        %1186 = vrot.lane.b32.xlu0 %v1072, 108
        %v1187 = vpop.permute.xlu0 %1186
        %v1189 = vsel %vm1083, %v1185, 0
        %v1192 = vsel %vm1083, %v1187, 0
        %1194 = vmatprep.subr.bf16.mxu0 0
        %1195 = vmatpush1.bf16.xpose.msra.mxu0 %v1192
        %1196 = vmatprep.subr.bf16.mxu0 0
        %1197 = vmatpush1.bf16.xpose.msra.mxu0 0
        %1198 = vmatprep.subr.bf16.mxu0 0
        %1199 = vmatpush1.bf16.xpose.msra.mxu0 0
        %1200 = vmatprep.subr.bf16.mxu0 0
        %1201 = vmatpush1.bf16.xpose.msra.mxu0 0
        %1202 = vmatprep.subr.bf16.mxu0 0
        %1203 = vmatpush1.bf16.xpose.msra.mxu0 0
        %1204 = vmatprep.subr.bf16.mxu0 0
        %1205 = vmatpush1.bf16.xpose.msra.mxu0 0
        %1206 = vmatprep.subr.bf16.mxu0 0
        %1207 = vmatpush1.bf16.xpose.msra.mxu0 0
        %1208 = vmatprep.subr.bf16.mxu0 0
        %1209 = vmatpush1.bf16.xpose.msra.mxu0 0
        %1210 = vmatprep.subr.bf16.mxu0 0
        %1211 = vmatpush1.bf16.xpose.msra.mxu0 0
        %1212 = vmatprep.subr.bf16.mxu0 0
        %1213 = vmatpush1.bf16.xpose.msra.mxu0 0
        %1214 = vmatprep.subr.bf16.mxu0 0
        %1215 = vmatpush1.bf16.xpose.msra.mxu0 0
        %1216 = vmatprep.subr.bf16.mxu0 0
        %1217 = vmatpush1.bf16.xpose.msra.mxu0 0
        %1218 = vmatprep.subr.bf16.mxu0 0
        %1219 = vmatpush1.bf16.xpose.msra.mxu0 0
        %1220 = vmatprep.subr.bf16.mxu0 0
        %1221 = vmatpush1.bf16.xpose.msra.mxu0 0
        %1222 = vmatprep.subr.bf16.mxu0 0
        %1223 = vmatpush1.bf16.xpose.msra.mxu0 0
        %1224 = vmatprep.subr.bf16.mxu0 0
        %1225 = vmatpush1.bf16.xpose.msra.mxu0 0
        %1226 = vmatprep.mubr.bf16.mxu0 0
        %1227 = vmatmul.mubr.bf16.gmra.mrb[0].mxu0 %v1189
        %v1228 = vpop.f32.mrb[0].mxu0
        %v1229 = vadd.f32 0.0, %v1228
        %v1230 = vpop.f32.mrb[0].mxu0
        %v1231 = vpop.f32.mrb[0].mxu0
        %v1232 = vadd.f32 0.0, %v1231
        %v1233 = vpop.f32.mrb[0].mxu0
        %1234 = vdwg.mxu0
        %1236 = vrot.lane.b32.xlu0 %v1073, 112
        %v1237 = vpop.permute.xlu0 %1236
        %1238 = vrot.lane.b32.xlu0 %v1073, 108
        %v1239 = vpop.permute.xlu0 %1238
        %v1241 = vsel %vm1083, %v1237, 0
        %v1244 = vsel %vm1083, %v1239, 0
        %1246 = vmatprep.subr.bf16.mxu0 0
        %1247 = vmatpush1.bf16.xpose.msra.mxu0 %v1244
        %1248 = vmatprep.subr.bf16.mxu0 0
        %1249 = vmatpush1.bf16.xpose.msra.mxu0 0
        %1250 = vmatprep.subr.bf16.mxu0 0
        %1251 = vmatpush1.bf16.xpose.msra.mxu0 0
        %1252 = vmatprep.subr.bf16.mxu0 0
        %1253 = vmatpush1.bf16.xpose.msra.mxu0 0
        %1254 = vmatprep.subr.bf16.mxu0 0
        %1255 = vmatpush1.bf16.xpose.msra.mxu0 0
        %1256 = vmatprep.subr.bf16.mxu0 0
        %1257 = vmatpush1.bf16.xpose.msra.mxu0 0
        %1258 = vmatprep.subr.bf16.mxu0 0
        %1259 = vmatpush1.bf16.xpose.msra.mxu0 0
        %1260 = vmatprep.subr.bf16.mxu0 0
        %1261 = vmatpush1.bf16.xpose.msra.mxu0 0
        %1262 = vmatprep.subr.bf16.mxu0 0
        %1263 = vmatpush1.bf16.xpose.msra.mxu0 0
        %1264 = vmatprep.subr.bf16.mxu0 0
        %1265 = vmatpush1.bf16.xpose.msra.mxu0 0
        %1266 = vmatprep.subr.bf16.mxu0 0
        %1267 = vmatpush1.bf16.xpose.msra.mxu0 0
        %1268 = vmatprep.subr.bf16.mxu0 0
        %1269 = vmatpush1.bf16.xpose.msra.mxu0 0
        %1270 = vmatprep.subr.bf16.mxu0 0
        %1271 = vmatpush1.bf16.xpose.msra.mxu0 0
        %1272 = vmatprep.subr.bf16.mxu0 0
        %1273 = vmatpush1.bf16.xpose.msra.mxu0 0
        %1274 = vmatprep.subr.bf16.mxu0 0
        %1275 = vmatpush1.bf16.xpose.msra.mxu0 0
        %1276 = vmatprep.subr.bf16.mxu0 0
        %1277 = vmatpush1.bf16.xpose.msra.mxu0 0
        %1278 = vmatprep.mubr.bf16.mxu0 0
        %1279 = vmatmul.mubr.bf16.gmra.mrb[0].mxu0 %v1241
        %v1280 = vpop.f32.mrb[0].mxu0
        %v1281 = vadd.f32 0.0, %v1280
        %v1282 = vpop.f32.mrb[0].mxu0
        %v1283 = vpop.f32.mrb[0].mxu0
        %v1284 = vadd.f32 0.0, %v1283
        %v1285 = vpop.f32.mrb[0].mxu0
        %1286 = vdwg.mxu0
        %1288 = vrot.lane.b32.xlu0 %v1074, 112
        %v1289 = vpop.permute.xlu0 %1288
        %1290 = vrot.lane.b32.xlu0 %v1074, 108
        %v1291 = vpop.permute.xlu0 %1290
        %v1293 = vsel %vm1083, %v1289, 0
        %v1296 = vsel %vm1083, %v1291, 0
        %1298 = vmatprep.subr.bf16.mxu0 0
        %1299 = vmatpush1.bf16.xpose.msra.mxu0 %v1296
        %1300 = vmatprep.subr.bf16.mxu0 0
        %1301 = vmatpush1.bf16.xpose.msra.mxu0 0
        %1302 = vmatprep.subr.bf16.mxu0 0
        %1303 = vmatpush1.bf16.xpose.msra.mxu0 0
        %1304 = vmatprep.subr.bf16.mxu0 0
        %1305 = vmatpush1.bf16.xpose.msra.mxu0 0
        %1306 = vmatprep.subr.bf16.mxu0 0
        %1307 = vmatpush1.bf16.xpose.msra.mxu0 0
        %1308 = vmatprep.subr.bf16.mxu0 0
        %1309 = vmatpush1.bf16.xpose.msra.mxu0 0
        %1310 = vmatprep.subr.bf16.mxu0 0
        %1311 = vmatpush1.bf16.xpose.msra.mxu0 0
        %1312 = vmatprep.subr.bf16.mxu0 0
        %1313 = vmatpush1.bf16.xpose.msra.mxu0 0
        %1314 = vmatprep.subr.bf16.mxu0 0
        %1315 = vmatpush1.bf16.xpose.msra.mxu0 0
        %1316 = vmatprep.subr.bf16.mxu0 0
        %1317 = vmatpush1.bf16.xpose.msra.mxu0 0
        %1318 = vmatprep.subr.bf16.mxu0 0
        %1319 = vmatpush1.bf16.xpose.msra.mxu0 0
        %1320 = vmatprep.subr.bf16.mxu0 0
        %1321 = vmatpush1.bf16.xpose.msra.mxu0 0
        %1322 = vmatprep.subr.bf16.mxu0 0
        %1323 = vmatpush1.bf16.xpose.msra.mxu0 0
        %1324 = vmatprep.subr.bf16.mxu0 0
        %1325 = vmatpush1.bf16.xpose.msra.mxu0 0
        %1326 = vmatprep.subr.bf16.mxu0 0
        %1327 = vmatpush1.bf16.xpose.msra.mxu0 0
        %1328 = vmatprep.subr.bf16.mxu0 0
        %1329 = vmatpush1.bf16.xpose.msra.mxu0 0
        %1330 = vmatprep.mubr.bf16.mxu0 0
        %1331 = vmatmul.mubr.bf16.gmra.mrb[0].mxu0 %v1293
        %v1332 = vpop.f32.mrb[0].mxu0
        %v1333 = vadd.f32 0.0, %v1332
        %v1334 = vpop.f32.mrb[0].mxu0
        %v1335 = vpop.f32.mrb[0].mxu0
        %v1336 = vadd.f32 0.0, %v1335
        %v1337 = vpop.f32.mrb[0].mxu0
        %1338 = vdwg.mxu0
        %1340 = vrot.lane.b32.xlu0 %v1075, 112
        %v1341 = vpop.permute.xlu0 %1340
        %1342 = vrot.lane.b32.xlu0 %v1075, 108
        %v1343 = vpop.permute.xlu0 %1342
        %v1345 = vsel %vm1083, %v1341, 0
        %v1348 = vsel %vm1083, %v1343, 0
        %1350 = vmatprep.subr.bf16.mxu0 0
        %1351 = vmatpush1.bf16.xpose.msra.mxu0 %v1348
        %1352 = vmatprep.subr.bf16.mxu0 0
        %1353 = vmatpush1.bf16.xpose.msra.mxu0 0
        %1354 = vmatprep.subr.bf16.mxu0 0
        %1355 = vmatpush1.bf16.xpose.msra.mxu0 0
        %1356 = vmatprep.subr.bf16.mxu0 0
        %1357 = vmatpush1.bf16.xpose.msra.mxu0 0
        %1358 = vmatprep.subr.bf16.mxu0 0
        %1359 = vmatpush1.bf16.xpose.msra.mxu0 0
        %1360 = vmatprep.subr.bf16.mxu0 0
        %1361 = vmatpush1.bf16.xpose.msra.mxu0 0
        %1362 = vmatprep.subr.bf16.mxu0 0
        %1363 = vmatpush1.bf16.xpose.msra.mxu0 0
        %1364 = vmatprep.subr.bf16.mxu0 0
        %1365 = vmatpush1.bf16.xpose.msra.mxu0 0
        %1366 = vmatprep.subr.bf16.mxu0 0
        %1367 = vmatpush1.bf16.xpose.msra.mxu0 0
        %1368 = vmatprep.subr.bf16.mxu0 0
        %1369 = vmatpush1.bf16.xpose.msra.mxu0 0
        %1370 = vmatprep.subr.bf16.mxu0 0
        %1371 = vmatpush1.bf16.xpose.msra.mxu0 0
        %1372 = vmatprep.subr.bf16.mxu0 0
        %1373 = vmatpush1.bf16.xpose.msra.mxu0 0
        %1374 = vmatprep.subr.bf16.mxu0 0
        %1375 = vmatpush1.bf16.xpose.msra.mxu0 0
        %1376 = vmatprep.subr.bf16.mxu0 0
        %1377 = vmatpush1.bf16.xpose.msra.mxu0 0
        %1378 = vmatprep.subr.bf16.mxu0 0
        %1379 = vmatpush1.bf16.xpose.msra.mxu0 0
        %1380 = vmatprep.subr.bf16.mxu0 0
        %1381 = vmatpush1.bf16.xpose.msra.mxu0 0
        %1382 = vmatprep.mubr.bf16.mxu0 0
        %1383 = vmatmul.mubr.bf16.gmra.mrb[0].mxu0 %v1345
        %v1384 = vpop.f32.mrb[0].mxu0
        %v1385 = vadd.f32 0.0, %v1384
        %v1386 = vpop.f32.mrb[0].mxu0
        %v1387 = vpop.f32.mrb[0].mxu0
        %v1388 = vadd.f32 0.0, %v1387
        %v1389 = vpop.f32.mrb[0].mxu0
        %1390 = vdwg.mxu0
        %1392 = vrot.lane.b32.xlu0 %v1076, 112
        %v1393 = vpop.permute.xlu0 %1392
        %1394 = vrot.lane.b32.xlu0 %v1076, 108
        %v1395 = vpop.permute.xlu0 %1394
        %v1397 = vsel %vm1083, %v1393, 0
        %v1400 = vsel %vm1083, %v1395, 0
        %1402 = vmatprep.subr.bf16.mxu0 0
        %1403 = vmatpush1.bf16.xpose.msra.mxu0 %v1400
        %1404 = vmatprep.subr.bf16.mxu0 0
        %1405 = vmatpush1.bf16.xpose.msra.mxu0 0
        %1406 = vmatprep.subr.bf16.mxu0 0
        %1407 = vmatpush1.bf16.xpose.msra.mxu0 0
        %1408 = vmatprep.subr.bf16.mxu0 0
        %1409 = vmatpush1.bf16.xpose.msra.mxu0 0
        %1410 = vmatprep.subr.bf16.mxu0 0
        %1411 = vmatpush1.bf16.xpose.msra.mxu0 0
        %1412 = vmatprep.subr.bf16.mxu0 0
        %1413 = vmatpush1.bf16.xpose.msra.mxu0 0
        %1414 = vmatprep.subr.bf16.mxu0 0
        %1415 = vmatpush1.bf16.xpose.msra.mxu0 0
        %1416 = vmatprep.subr.bf16.mxu0 0
        %1417 = vmatpush1.bf16.xpose.msra.mxu0 0
        %1418 = vmatprep.subr.bf16.mxu0 0
        %1419 = vmatpush1.bf16.xpose.msra.mxu0 0
        %1420 = vmatprep.subr.bf16.mxu0 0
        %1421 = vmatpush1.bf16.xpose.msra.mxu0 0
        %1422 = vmatprep.subr.bf16.mxu0 0
        %1423 = vmatpush1.bf16.xpose.msra.mxu0 0
        %1424 = vmatprep.subr.bf16.mxu0 0
        %1425 = vmatpush1.bf16.xpose.msra.mxu0 0
        %1426 = vmatprep.subr.bf16.mxu0 0
        %1427 = vmatpush1.bf16.xpose.msra.mxu0 0
        %1428 = vmatprep.subr.bf16.mxu0 0
        %1429 = vmatpush1.bf16.xpose.msra.mxu0 0
        %1430 = vmatprep.subr.bf16.mxu0 0
        %1431 = vmatpush1.bf16.xpose.msra.mxu0 0
        %1432 = vmatprep.subr.bf16.mxu0 0
        %1433 = vmatpush1.bf16.xpose.msra.mxu0 0
        %1434 = vmatprep.mubr.bf16.mxu0 0
        %1435 = vmatmul.mubr.bf16.gmra.mrb[0].mxu0 %v1397
        %v1436 = vpop.f32.mrb[0].mxu0
        %v1437 = vadd.f32 0.0, %v1436
        %v1438 = vpop.f32.mrb[0].mxu0
        %v1439 = vpop.f32.mrb[0].mxu0
        %v1440 = vadd.f32 0.0, %v1439
        %v1441 = vpop.f32.mrb[0].mxu0
        %1442 = vdwg.mxu0
        %1444 = vrot.lane.b32.xlu0 %v1077, 112
        %v1445 = vpop.permute.xlu0 %1444
        %1446 = vrot.lane.b32.xlu0 %v1077, 108
        %v1447 = vpop.permute.xlu0 %1446
        %v1449 = vsel %vm1083, %v1445, 0
        %v1452 = vsel %vm1083, %v1447, 0
        %1454 = vmatprep.subr.bf16.mxu0 0
        %1455 = vmatpush1.bf16.xpose.msra.mxu0 %v1452
        %1456 = vmatprep.subr.bf16.mxu0 0
        %1457 = vmatpush1.bf16.xpose.msra.mxu0 0
        %1458 = vmatprep.subr.bf16.mxu0 0
        %1459 = vmatpush1.bf16.xpose.msra.mxu0 0
        %1460 = vmatprep.subr.bf16.mxu0 0
        %1461 = vmatpush1.bf16.xpose.msra.mxu0 0
        %1462 = vmatprep.subr.bf16.mxu0 0
        %1463 = vmatpush1.bf16.xpose.msra.mxu0 0
        %1464 = vmatprep.subr.bf16.mxu0 0
        %1465 = vmatpush1.bf16.xpose.msra.mxu0 0
        %1466 = vmatprep.subr.bf16.mxu0 0
        %1467 = vmatpush1.bf16.xpose.msra.mxu0 0
        %1468 = vmatprep.subr.bf16.mxu0 0
        %1469 = vmatpush1.bf16.xpose.msra.mxu0 0
        %1470 = vmatprep.subr.bf16.mxu0 0
        %1471 = vmatpush1.bf16.xpose.msra.mxu0 0
        %1472 = vmatprep.subr.bf16.mxu0 0
        %1473 = vmatpush1.bf16.xpose.msra.mxu0 0
        %1474 = vmatprep.subr.bf16.mxu0 0
        %1475 = vmatpush1.bf16.xpose.msra.mxu0 0
        %1476 = vmatprep.subr.bf16.mxu0 0
        %1477 = vmatpush1.bf16.xpose.msra.mxu0 0
        %1478 = vmatprep.subr.bf16.mxu0 0
        %1479 = vmatpush1.bf16.xpose.msra.mxu0 0
        %1480 = vmatprep.subr.bf16.mxu0 0
        %1481 = vmatpush1.bf16.xpose.msra.mxu0 0
        %1482 = vmatprep.subr.bf16.mxu0 0
        %1483 = vmatpush1.bf16.xpose.msra.mxu0 0
        %1484 = vmatprep.subr.bf16.mxu0 0
        %1485 = vmatpush1.bf16.xpose.msra.mxu0 0
        %1486 = vmatprep.mubr.bf16.mxu0 0
        %1487 = vmatmul.mubr.bf16.gmra.mrb[0].mxu0 %v1449
        %v1488 = vpop.f32.mrb[0].mxu0
        %v1489 = vadd.f32 0.0, %v1488
        %v1490 = vpop.f32.mrb[0].mxu0
        %v1491 = vpop.f32.mrb[0].mxu0
        %v1492 = vadd.f32 0.0, %v1491
        %v1493 = vpop.f32.mrb[0].mxu0
        %1494 = vdwg.mxu0
        %v1495 = vsel %vm932, %v1125, -inf
        %1496 = vmax.xlane.f32.xlu0 %v1495
        %v1497 = vpop.xlane.xlu0 %1496
        %v1498 = vsel %vm932, %v1128, -inf
        %1499 = vmax.xlane.f32.xlu0 %v1498
        %v1500 = vpop.xlane.xlu0 %1499
        %v1501 = vsel %vm932, %v1177, -inf
        %1502 = vmax.xlane.f32.xlu0 %v1501
        %v1503 = vpop.xlane.xlu0 %1502
        %v1504 = vsel %vm932, %v1180, -inf
        %1505 = vmax.xlane.f32.xlu0 %v1504
        %v1506 = vpop.xlane.xlu0 %1505
        %v1507 = vsel %vm932, %v1229, -inf
        %1508 = vmax.xlane.f32.xlu0 %v1507
        %v1509 = vpop.xlane.xlu0 %1508
        %v1510 = vsel %vm932, %v1232, -inf
        %1511 = vmax.xlane.f32.xlu0 %v1510
        %v1512 = vpop.xlane.xlu0 %1511
        %v1513 = vsel %vm932, %v1281, -inf
        %1514 = vmax.xlane.f32.xlu0 %v1513
        %v1515 = vpop.xlane.xlu0 %1514
        %v1516 = vsel %vm932, %v1284, -inf
        %1517 = vmax.xlane.f32.xlu0 %v1516
        %v1518 = vpop.xlane.xlu0 %1517
        %v1519 = vsel %vm932, %v1333, -inf
        %1520 = vmax.xlane.f32.xlu0 %v1519
        %v1521 = vpop.xlane.xlu0 %1520
        %v1522 = vsel %vm932, %v1336, -inf
        %1523 = vmax.xlane.f32.xlu0 %v1522
        %v1524 = vpop.xlane.xlu0 %1523
        %v1525 = vsel %vm932, %v1385, -inf
        %1526 = vmax.xlane.f32.xlu0 %v1525
        %v1527 = vpop.xlane.xlu0 %1526
        %v1528 = vsel %vm932, %v1388, -inf
        %1529 = vmax.xlane.f32.xlu0 %v1528
        %v1530 = vpop.xlane.xlu0 %1529
        %v1531 = vsel %vm932, %v1437, -inf
        %1532 = vmax.xlane.f32.xlu0 %v1531
        %v1533 = vpop.xlane.xlu0 %1532
        %v1534 = vsel %vm932, %v1440, -inf
        %1535 = vmax.xlane.f32.xlu0 %v1534
        %v1536 = vpop.xlane.xlu0 %1535
        %v1537 = vsel %vm932, %v1489, -inf
        %1538 = vmax.xlane.f32.xlu0 %v1537
        %v1539 = vpop.xlane.xlu0 %1538
        %v1540 = vsel %vm932, %v1492, -inf
        %1541 = vmax.xlane.f32.xlu0 %v1540
        %v1542 = vpop.xlane.xlu0 %1541
        %v1543 = vsub.f32 %v1125, %v1497
        %v1544 = vsub.f32 %v1128, %v1500
        %v1545 = vsub.f32 %v1177, %v1503
        %v1546 = vsub.f32 %v1180, %v1506
        %v1547 = vsub.f32 %v1229, %v1509
        %v1548 = vsub.f32 %v1232, %v1512
        %v1549 = vsub.f32 %v1281, %v1515
        %v1550 = vsub.f32 %v1284, %v1518
        %v1551 = vsub.f32 %v1333, %v1521
        %v1552 = vsub.f32 %v1336, %v1524
        %v1553 = vsub.f32 %v1385, %v1527
        %v1554 = vsub.f32 %v1388, %v1530
        %v1555 = vsub.f32 %v1437, %v1533
        %v1556 = vsub.f32 %v1440, %v1536
        %v1557 = vsub.f32 %v1489, %v1539
        %v1558 = vsub.f32 %v1492, %v1542
        %v1559 = vmul.f32 %v1543, 1.442695
        %v1560 = vpow.pop %v1559
        %v1561 = vmul.f32 %v1544, 1.442695
        %v1562 = vpow.pop %v1561
        %v1563 = vmul.f32 %v1545, 1.442695
        %v1564 = vpow.pop %v1563
        %v1565 = vmul.f32 %v1546, 1.442695
        %v1566 = vpow.pop %v1565
        %v1567 = vmul.f32 %v1547, 1.442695
        %v1568 = vpow.pop %v1567
        %v1569 = vmul.f32 %v1548, 1.442695
        %v1570 = vpow.pop %v1569
        %v1571 = vmul.f32 %v1549, 1.442695
        %v1572 = vpow.pop %v1571
        %v1573 = vmul.f32 %v1550, 1.442695
        %v1574 = vpow.pop %v1573
        %v1575 = vmul.f32 %v1551, 1.442695
        %v1576 = vpow.pop %v1575
        %v1577 = vmul.f32 %v1552, 1.442695
        %v1578 = vpow.pop %v1577
        %v1579 = vmul.f32 %v1553, 1.442695
        %v1580 = vpow.pop %v1579
        %v1581 = vmul.f32 %v1554, 1.442695
        %v1582 = vpow.pop %v1581
        %v1583 = vmul.f32 %v1555, 1.442695
        %v1584 = vpow.pop %v1583
        %v1585 = vmul.f32 %v1556, 1.442695
        %v1586 = vpow.pop %v1585
        %v1587 = vmul.f32 %v1557, 1.442695
        %v1588 = vpow.pop %v1587
        %v1589 = vmul.f32 %v1558, 1.442695
        %v1590 = vpow.pop %v1589
        %v1591 = vsel %vm932, %v1560, 0.0
        %1592 = vadd.xlane.f32.xlu0 %v1591
        %v1593 = vpop.xlane.xlu0 %1592
        %v1594 = vsel %vm932, %v1562, 0.0
        %1595 = vadd.xlane.f32.xlu0 %v1594
        %v1596 = vpop.xlane.xlu0 %1595
        %v1597 = vsel %vm932, %v1564, 0.0
        %1598 = vadd.xlane.f32.xlu0 %v1597
        %v1599 = vpop.xlane.xlu0 %1598
        %v1600 = vsel %vm932, %v1566, 0.0
        %1601 = vadd.xlane.f32.xlu0 %v1600
        %v1602 = vpop.xlane.xlu0 %1601
        %v1603 = vsel %vm932, %v1568, 0.0
        %1604 = vadd.xlane.f32.xlu0 %v1603
        %v1605 = vpop.xlane.xlu0 %1604
        %v1606 = vsel %vm932, %v1570, 0.0
        %1607 = vadd.xlane.f32.xlu0 %v1606
        %v1608 = vpop.xlane.xlu0 %1607
        %v1609 = vsel %vm932, %v1572, 0.0
        %1610 = vadd.xlane.f32.xlu0 %v1609
        %v1611 = vpop.xlane.xlu0 %1610
        %v1612 = vsel %vm932, %v1574, 0.0
        %1613 = vadd.xlane.f32.xlu0 %v1612
        %v1614 = vpop.xlane.xlu0 %1613
        %v1615 = vsel %vm932, %v1576, 0.0
        %1616 = vadd.xlane.f32.xlu0 %v1615
        %v1617 = vpop.xlane.xlu0 %1616
        %v1618 = vsel %vm932, %v1578, 0.0
        %1619 = vadd.xlane.f32.xlu0 %v1618
        %v1620 = vpop.xlane.xlu0 %1619
        %v1621 = vsel %vm932, %v1580, 0.0
        %1622 = vadd.xlane.f32.xlu0 %v1621
        %v1623 = vpop.xlane.xlu0 %1622
        %v1624 = vsel %vm932, %v1582, 0.0
        %1625 = vadd.xlane.f32.xlu0 %v1624
        %v1626 = vpop.xlane.xlu0 %1625
        %v1627 = vsel %vm932, %v1584, 0.0
        %1628 = vadd.xlane.f32.xlu0 %v1627
        %v1629 = vpop.xlane.xlu0 %1628
        %v1630 = vsel %vm932, %v1586, 0.0
        %1631 = vadd.xlane.f32.xlu0 %v1630
        %v1632 = vpop.xlane.xlu0 %1631
        %v1633 = vsel %vm932, %v1588, 0.0
        %1634 = vadd.xlane.f32.xlu0 %v1633
        %v1635 = vpop.xlane.xlu0 %1634
        %v1636 = vsel %vm932, %v1590, 0.0
        %1637 = vadd.xlane.f32.xlu0 %v1636
        %v1638 = vpop.xlane.xlu0 %1637
        %v1639 = vrcp.pop %v1593
        %v1640 = vrcp.pop %v1596
        %v1641 = vrcp.pop %v1599
        %v1642 = vrcp.pop %v1602
        %v1643 = vrcp.pop %v1605
        %v1644 = vrcp.pop %v1608
        %v1645 = vrcp.pop %v1611
        %v1646 = vrcp.pop %v1614
        %v1647 = vrcp.pop %v1617
        %v1648 = vrcp.pop %v1620
        %v1649 = vrcp.pop %v1623
        %v1650 = vrcp.pop %v1626
        %v1651 = vrcp.pop %v1629
        %v1652 = vrcp.pop %v1632
        %v1653 = vrcp.pop %v1635
        %v1654 = vrcp.pop %v1638
        %v1655 = vmul.f32 %v1560, %v1639
        %v1656 = vmul.f32 %v1562, %v1640
        %v1657 = vmul.f32 %v1564, %v1641
        %v1658 = vmul.f32 %v1566, %v1642
        %v1659 = vmul.f32 %v1568, %v1643
        %v1660 = vmul.f32 %v1570, %v1644
        %v1661 = vmul.f32 %v1572, %v1645
        %v1662 = vmul.f32 %v1574, %v1646
        %v1663 = vmul.f32 %v1576, %v1647
        %v1664 = vmul.f32 %v1578, %v1648
        %v1665 = vmul.f32 %v1580, %v1649
        %v1666 = vmul.f32 %v1582, %v1650
        %v1667 = vmul.f32 %v1584, %v1651
        %v1668 = vmul.f32 %v1586, %v1652
        %v1669 = vmul.f32 %v1588, %v1653
        %v1670 = vmul.f32 %v1590, %v1654
        %v1671 = vpack.c.bf16 %v1656, %v1655
        %v1672 = vpack.c.bf16 %v1658, %v1657
        %v1673 = vpack.c.bf16 %v1660, %v1659
        %v1674 = vpack.c.bf16 %v1662, %v1661
        %v1675 = vpack.c.bf16 %v1664, %v1663
        %v1676 = vpack.c.bf16 %v1666, %v1665
        %v1677 = vpack.c.bf16 %v1668, %v1667
        %v1678 = vpack.c.bf16 %v1670, %v1669
        %v1680 = vsel %vm932, %v1671, 0
        %1682 = vmatprep.subr.bf16.mxu0 0
        %1683 = vmatpush1.bf16.msra.mxu0 %v1070
        %1684 = vmatprep.subr.bf16.mxu0 0
        %1685 = vmatpush1.bf16.msra.mxu0 0
        %1686 = vmatprep.subr.bf16.mxu0 0
        %1687 = vmatpush1.bf16.msra.mxu0 0
        %1688 = vmatprep.subr.bf16.mxu0 0
        %1689 = vmatpush1.bf16.msra.mxu0 0
        %1690 = vmatprep.subr.bf16.mxu0 0
        %1691 = vmatpush1.bf16.msra.mxu0 0
        %1692 = vmatprep.subr.bf16.mxu0 0
        %1693 = vmatpush1.bf16.msra.mxu0 0
        %1694 = vmatprep.subr.bf16.mxu0 0
        %1695 = vmatpush1.bf16.msra.mxu0 0
        %1696 = vmatprep.subr.bf16.mxu0 0
        %1697 = vmatpush1.bf16.msra.mxu0 0
        %1698 = vmatprep.subr.bf16.mxu0 0
        %1699 = vmatpush1.bf16.msra.mxu0 0
        %1700 = vmatprep.subr.bf16.mxu0 0
        %1701 = vmatpush1.bf16.msra.mxu0 0
        %1702 = vmatprep.subr.bf16.mxu0 0
        %1703 = vmatpush1.bf16.msra.mxu0 0
        %1704 = vmatprep.subr.bf16.mxu0 0
        %1705 = vmatpush1.bf16.msra.mxu0 0
        %1706 = vmatprep.subr.bf16.mxu0 0
        %1707 = vmatpush1.bf16.msra.mxu0 0
        %1708 = vmatprep.subr.bf16.mxu0 0
        %1709 = vmatpush1.bf16.msra.mxu0 0
        %1710 = vmatprep.subr.bf16.mxu0 0
        %1711 = vmatpush1.bf16.msra.mxu0 0
        %1712 = vmatprep.subr.bf16.mxu0 0
        %1713 = vmatpush1.bf16.msra.mxu0 0
        %1714 = vmatprep.mubr.bf16.mxu0 0
        %1715 = vmatmul.mubr.bf16.gmra.mrb[0].mxu0 %v1680
        %v1716 = vpop.f32.mrb[0].mxu0
        %v1717 = vadd.f32 0.0, %v1716
        %v1718 = vpop.f32.mrb[0].mxu0
        %v1719 = vpop.f32.mrb[0].mxu0
        %v1720 = vadd.f32 0.0, %v1719
        %v1721 = vpop.f32.mrb[0].mxu0
        %1722 = vdwg.mxu0
        %v1724 = vsel %vm932, %v1672, 0
        %1726 = vmatprep.subr.bf16.mxu0 0
        %1727 = vmatpush1.bf16.msra.mxu0 %v1071
        %1728 = vmatprep.subr.bf16.mxu0 0
        %1729 = vmatpush1.bf16.msra.mxu0 0
        %1730 = vmatprep.subr.bf16.mxu0 0
        %1731 = vmatpush1.bf16.msra.mxu0 0
        %1732 = vmatprep.subr.bf16.mxu0 0
        %1733 = vmatpush1.bf16.msra.mxu0 0
        %1734 = vmatprep.subr.bf16.mxu0 0
        %1735 = vmatpush1.bf16.msra.mxu0 0
        %1736 = vmatprep.subr.bf16.mxu0 0
        %1737 = vmatpush1.bf16.msra.mxu0 0
        %1738 = vmatprep.subr.bf16.mxu0 0
        %1739 = vmatpush1.bf16.msra.mxu0 0
        %1740 = vmatprep.subr.bf16.mxu0 0
        %1741 = vmatpush1.bf16.msra.mxu0 0
        %1742 = vmatprep.subr.bf16.mxu0 0
        %1743 = vmatpush1.bf16.msra.mxu0 0
        %1744 = vmatprep.subr.bf16.mxu0 0
        %1745 = vmatpush1.bf16.msra.mxu0 0
        %1746 = vmatprep.subr.bf16.mxu0 0
        %1747 = vmatpush1.bf16.msra.mxu0 0
        %1748 = vmatprep.subr.bf16.mxu0 0
        %1749 = vmatpush1.bf16.msra.mxu0 0
        %1750 = vmatprep.subr.bf16.mxu0 0
        %1751 = vmatpush1.bf16.msra.mxu0 0
        %1752 = vmatprep.subr.bf16.mxu0 0
        %1753 = vmatpush1.bf16.msra.mxu0 0
        %1754 = vmatprep.subr.bf16.mxu0 0
        %1755 = vmatpush1.bf16.msra.mxu0 0
        %1756 = vmatprep.subr.bf16.mxu0 0
        %1757 = vmatpush1.bf16.msra.mxu0 0
        %1758 = vmatprep.mubr.bf16.mxu0 0
        %1759 = vmatmul.mubr.bf16.gmra.mrb[0].mxu0 %v1724
        %v1760 = vpop.f32.mrb[0].mxu0
        %v1761 = vadd.f32 0.0, %v1760
        %v1762 = vpop.f32.mrb[0].mxu0
        %v1763 = vpop.f32.mrb[0].mxu0
        %v1764 = vadd.f32 0.0, %v1763
        %v1765 = vpop.f32.mrb[0].mxu0
        %1766 = vdwg.mxu0
        %v1768 = vsel %vm932, %v1673, 0
        %1770 = vmatprep.subr.bf16.mxu0 0
        %1771 = vmatpush1.bf16.msra.mxu0 %v1072
        %1772 = vmatprep.subr.bf16.mxu0 0
        %1773 = vmatpush1.bf16.msra.mxu0 0
        %1774 = vmatprep.subr.bf16.mxu0 0
        %1775 = vmatpush1.bf16.msra.mxu0 0
        %1776 = vmatprep.subr.bf16.mxu0 0
        %1777 = vmatpush1.bf16.msra.mxu0 0
        %1778 = vmatprep.subr.bf16.mxu0 0
        %1779 = vmatpush1.bf16.msra.mxu0 0
        %1780 = vmatprep.subr.bf16.mxu0 0
        %1781 = vmatpush1.bf16.msra.mxu0 0
        %1782 = vmatprep.subr.bf16.mxu0 0
        %1783 = vmatpush1.bf16.msra.mxu0 0
        %1784 = vmatprep.subr.bf16.mxu0 0
        %1785 = vmatpush1.bf16.msra.mxu0 0
        %1786 = vmatprep.subr.bf16.mxu0 0
        %1787 = vmatpush1.bf16.msra.mxu0 0
        %1788 = vmatprep.subr.bf16.mxu0 0
        %1789 = vmatpush1.bf16.msra.mxu0 0
        %1790 = vmatprep.subr.bf16.mxu0 0
        %1791 = vmatpush1.bf16.msra.mxu0 0
        %1792 = vmatprep.subr.bf16.mxu0 0
        %1793 = vmatpush1.bf16.msra.mxu0 0
        %1794 = vmatprep.subr.bf16.mxu0 0
        %1795 = vmatpush1.bf16.msra.mxu0 0
        %1796 = vmatprep.subr.bf16.mxu0 0
        %1797 = vmatpush1.bf16.msra.mxu0 0
        %1798 = vmatprep.subr.bf16.mxu0 0
        %1799 = vmatpush1.bf16.msra.mxu0 0
        %1800 = vmatprep.subr.bf16.mxu0 0
        %1801 = vmatpush1.bf16.msra.mxu0 0
        %1802 = vmatprep.mubr.bf16.mxu0 0
        %1803 = vmatmul.mubr.bf16.gmra.mrb[0].mxu0 %v1768
        %v1804 = vpop.f32.mrb[0].mxu0
        %v1805 = vadd.f32 0.0, %v1804
        %v1806 = vpop.f32.mrb[0].mxu0
        %v1807 = vpop.f32.mrb[0].mxu0
        %v1808 = vadd.f32 0.0, %v1807
        %v1809 = vpop.f32.mrb[0].mxu0
        %1810 = vdwg.mxu0
        %v1812 = vsel %vm932, %v1674, 0
        %1814 = vmatprep.subr.bf16.mxu0 0
        %1815 = vmatpush1.bf16.msra.mxu0 %v1073
        %1816 = vmatprep.subr.bf16.mxu0 0
        %1817 = vmatpush1.bf16.msra.mxu0 0
        %1818 = vmatprep.subr.bf16.mxu0 0
        %1819 = vmatpush1.bf16.msra.mxu0 0
        %1820 = vmatprep.subr.bf16.mxu0 0
        %1821 = vmatpush1.bf16.msra.mxu0 0
        %1822 = vmatprep.subr.bf16.mxu0 0
        %1823 = vmatpush1.bf16.msra.mxu0 0
        %1824 = vmatprep.subr.bf16.mxu0 0
        %1825 = vmatpush1.bf16.msra.mxu0 0
        %1826 = vmatprep.subr.bf16.mxu0 0
        %1827 = vmatpush1.bf16.msra.mxu0 0
        %1828 = vmatprep.subr.bf16.mxu0 0
        %1829 = vmatpush1.bf16.msra.mxu0 0
        %1830 = vmatprep.subr.bf16.mxu0 0
        %1831 = vmatpush1.bf16.msra.mxu0 0
        %1832 = vmatprep.subr.bf16.mxu0 0
        %1833 = vmatpush1.bf16.msra.mxu0 0
        %1834 = vmatprep.subr.bf16.mxu0 0
        %1835 = vmatpush1.bf16.msra.mxu0 0
        %1836 = vmatprep.subr.bf16.mxu0 0
        %1837 = vmatpush1.bf16.msra.mxu0 0
        %1838 = vmatprep.subr.bf16.mxu0 0
        %1839 = vmatpush1.bf16.msra.mxu0 0
        %1840 = vmatprep.subr.bf16.mxu0 0
        %1841 = vmatpush1.bf16.msra.mxu0 0
        %1842 = vmatprep.subr.bf16.mxu0 0
        %1843 = vmatpush1.bf16.msra.mxu0 0
        %1844 = vmatprep.subr.bf16.mxu0 0
        %1845 = vmatpush1.bf16.msra.mxu0 0
        %1846 = vmatprep.mubr.bf16.mxu0 0
        %1847 = vmatmul.mubr.bf16.gmra.mrb[0].mxu0 %v1812
        %v1848 = vpop.f32.mrb[0].mxu0
        %v1849 = vadd.f32 0.0, %v1848
        %v1850 = vpop.f32.mrb[0].mxu0
        %v1851 = vpop.f32.mrb[0].mxu0
        %v1852 = vadd.f32 0.0, %v1851
        %v1853 = vpop.f32.mrb[0].mxu0
        %1854 = vdwg.mxu0
        %v1856 = vsel %vm932, %v1675, 0
        %1858 = vmatprep.subr.bf16.mxu0 0
        %1859 = vmatpush1.bf16.msra.mxu0 %v1074
        %1860 = vmatprep.subr.bf16.mxu0 0
        %1861 = vmatpush1.bf16.msra.mxu0 0
        %1862 = vmatprep.subr.bf16.mxu0 0
        %1863 = vmatpush1.bf16.msra.mxu0 0
        %1864 = vmatprep.subr.bf16.mxu0 0
        %1865 = vmatpush1.bf16.msra.mxu0 0
        %1866 = vmatprep.subr.bf16.mxu0 0
        %1867 = vmatpush1.bf16.msra.mxu0 0
        %1868 = vmatprep.subr.bf16.mxu0 0
        %1869 = vmatpush1.bf16.msra.mxu0 0
        %1870 = vmatprep.subr.bf16.mxu0 0
        %1871 = vmatpush1.bf16.msra.mxu0 0
        %1872 = vmatprep.subr.bf16.mxu0 0
        %1873 = vmatpush1.bf16.msra.mxu0 0
        %1874 = vmatprep.subr.bf16.mxu0 0
        %1875 = vmatpush1.bf16.msra.mxu0 0
        %1876 = vmatprep.subr.bf16.mxu0 0
        %1877 = vmatpush1.bf16.msra.mxu0 0
        %1878 = vmatprep.subr.bf16.mxu0 0
        %1879 = vmatpush1.bf16.msra.mxu0 0
        %1880 = vmatprep.subr.bf16.mxu0 0
        %1881 = vmatpush1.bf16.msra.mxu0 0
        %1882 = vmatprep.subr.bf16.mxu0 0
        %1883 = vmatpush1.bf16.msra.mxu0 0
        %1884 = vmatprep.subr.bf16.mxu0 0
        %1885 = vmatpush1.bf16.msra.mxu0 0
        %1886 = vmatprep.subr.bf16.mxu0 0
        %1887 = vmatpush1.bf16.msra.mxu0 0
        %1888 = vmatprep.subr.bf16.mxu0 0
        %1889 = vmatpush1.bf16.msra.mxu0 0
        %1890 = vmatprep.mubr.bf16.mxu0 0
        %1891 = vmatmul.mubr.bf16.gmra.mrb[0].mxu0 %v1856
        %v1892 = vpop.f32.mrb[0].mxu0
        %v1893 = vadd.f32 0.0, %v1892
        %v1894 = vpop.f32.mrb[0].mxu0
        %v1895 = vpop.f32.mrb[0].mxu0
        %v1896 = vadd.f32 0.0, %v1895
        %v1897 = vpop.f32.mrb[0].mxu0
        %1898 = vdwg.mxu0
        %v1900 = vsel %vm932, %v1676, 0
        %1902 = vmatprep.subr.bf16.mxu0 0
        %1903 = vmatpush1.bf16.msra.mxu0 %v1075
        %1904 = vmatprep.subr.bf16.mxu0 0
        %1905 = vmatpush1.bf16.msra.mxu0 0
        %1906 = vmatprep.subr.bf16.mxu0 0
        %1907 = vmatpush1.bf16.msra.mxu0 0
        %1908 = vmatprep.subr.bf16.mxu0 0
        %1909 = vmatpush1.bf16.msra.mxu0 0
        %1910 = vmatprep.subr.bf16.mxu0 0
        %1911 = vmatpush1.bf16.msra.mxu0 0
        %1912 = vmatprep.subr.bf16.mxu0 0
        %1913 = vmatpush1.bf16.msra.mxu0 0
        %1914 = vmatprep.subr.bf16.mxu0 0
        %1915 = vmatpush1.bf16.msra.mxu0 0
        %1916 = vmatprep.subr.bf16.mxu0 0
        %1917 = vmatpush1.bf16.msra.mxu0 0
        %1918 = vmatprep.subr.bf16.mxu0 0
        %1919 = vmatpush1.bf16.msra.mxu0 0
        %1920 = vmatprep.subr.bf16.mxu0 0
        %1921 = vmatpush1.bf16.msra.mxu0 0
        %1922 = vmatprep.subr.bf16.mxu0 0
        %1923 = vmatpush1.bf16.msra.mxu0 0
        %1924 = vmatprep.subr.bf16.mxu0 0
        %1925 = vmatpush1.bf16.msra.mxu0 0
        %1926 = vmatprep.subr.bf16.mxu0 0
        %1927 = vmatpush1.bf16.msra.mxu0 0
        %1928 = vmatprep.subr.bf16.mxu0 0
        %1929 = vmatpush1.bf16.msra.mxu0 0
        %1930 = vmatprep.subr.bf16.mxu0 0
        %1931 = vmatpush1.bf16.msra.mxu0 0
        %1932 = vmatprep.subr.bf16.mxu0 0
        %1933 = vmatpush1.bf16.msra.mxu0 0
        %1934 = vmatprep.mubr.bf16.mxu0 0
        %1935 = vmatmul.mubr.bf16.gmra.mrb[0].mxu0 %v1900
        %v1936 = vpop.f32.mrb[0].mxu0
        %v1937 = vadd.f32 0.0, %v1936
        %v1938 = vpop.f32.mrb[0].mxu0
        %v1939 = vpop.f32.mrb[0].mxu0
        %v1940 = vadd.f32 0.0, %v1939
        %v1941 = vpop.f32.mrb[0].mxu0
        %1942 = vdwg.mxu0
        %v1944 = vsel %vm932, %v1677, 0
        %1946 = vmatprep.subr.bf16.mxu0 0
        %1947 = vmatpush1.bf16.msra.mxu0 %v1076
        %1948 = vmatprep.subr.bf16.mxu0 0
        %1949 = vmatpush1.bf16.msra.mxu0 0
        %1950 = vmatprep.subr.bf16.mxu0 0
        %1951 = vmatpush1.bf16.msra.mxu0 0
        %1952 = vmatprep.subr.bf16.mxu0 0
        %1953 = vmatpush1.bf16.msra.mxu0 0
        %1954 = vmatprep.subr.bf16.mxu0 0
        %1955 = vmatpush1.bf16.msra.mxu0 0
        %1956 = vmatprep.subr.bf16.mxu0 0
        %1957 = vmatpush1.bf16.msra.mxu0 0
        %1958 = vmatprep.subr.bf16.mxu0 0
        %1959 = vmatpush1.bf16.msra.mxu0 0
        %1960 = vmatprep.subr.bf16.mxu0 0
        %1961 = vmatpush1.bf16.msra.mxu0 0
        %1962 = vmatprep.subr.bf16.mxu0 0
        %1963 = vmatpush1.bf16.msra.mxu0 0
        %1964 = vmatprep.subr.bf16.mxu0 0
        %1965 = vmatpush1.bf16.msra.mxu0 0
        %1966 = vmatprep.subr.bf16.mxu0 0
        %1967 = vmatpush1.bf16.msra.mxu0 0
        %1968 = vmatprep.subr.bf16.mxu0 0
        %1969 = vmatpush1.bf16.msra.mxu0 0
        %1970 = vmatprep.subr.bf16.mxu0 0
        %1971 = vmatpush1.bf16.msra.mxu0 0
        %1972 = vmatprep.subr.bf16.mxu0 0
        %1973 = vmatpush1.bf16.msra.mxu0 0
        %1974 = vmatprep.subr.bf16.mxu0 0
        %1975 = vmatpush1.bf16.msra.mxu0 0
        %1976 = vmatprep.subr.bf16.mxu0 0
        %1977 = vmatpush1.bf16.msra.mxu0 0
        %1978 = vmatprep.mubr.bf16.mxu0 0
        %1979 = vmatmul.mubr.bf16.gmra.mrb[0].mxu0 %v1944
        %v1980 = vpop.f32.mrb[0].mxu0
        %v1981 = vadd.f32 0.0, %v1980
        %v1982 = vpop.f32.mrb[0].mxu0
        %v1983 = vpop.f32.mrb[0].mxu0
        %v1984 = vadd.f32 0.0, %v1983
        %v1985 = vpop.f32.mrb[0].mxu0
        %1986 = vdwg.mxu0
        %v1988 = vsel %vm932, %v1678, 0
        %1990 = vmatprep.subr.bf16.mxu0 0
        %1991 = vmatpush1.bf16.msra.mxu0 %v1077
        %1992 = vmatprep.subr.bf16.mxu0 0
        %1993 = vmatpush1.bf16.msra.mxu0 0
        %1994 = vmatprep.subr.bf16.mxu0 0
        %1995 = vmatpush1.bf16.msra.mxu0 0
        %1996 = vmatprep.subr.bf16.mxu0 0
        %1997 = vmatpush1.bf16.msra.mxu0 0
        %1998 = vmatprep.subr.bf16.mxu0 0
        %1999 = vmatpush1.bf16.msra.mxu0 0
        %2000 = vmatprep.subr.bf16.mxu0 0
        %2001 = vmatpush1.bf16.msra.mxu0 0
        %2002 = vmatprep.subr.bf16.mxu0 0
        %2003 = vmatpush1.bf16.msra.mxu0 0
        %2004 = vmatprep.subr.bf16.mxu0 0
        %2005 = vmatpush1.bf16.msra.mxu0 0
        %2006 = vmatprep.subr.bf16.mxu0 0
        %2007 = vmatpush1.bf16.msra.mxu0 0
        %2008 = vmatprep.subr.bf16.mxu0 0
        %2009 = vmatpush1.bf16.msra.mxu0 0
        %2010 = vmatprep.subr.bf16.mxu0 0
        %2011 = vmatpush1.bf16.msra.mxu0 0
        %2012 = vmatprep.subr.bf16.mxu0 0
        %2013 = vmatpush1.bf16.msra.mxu0 0
        %2014 = vmatprep.subr.bf16.mxu0 0
        %2015 = vmatpush1.bf16.msra.mxu0 0
        %2016 = vmatprep.subr.bf16.mxu0 0
        %2017 = vmatpush1.bf16.msra.mxu0 0
        %2018 = vmatprep.subr.bf16.mxu0 0
        %2019 = vmatpush1.bf16.msra.mxu0 0
        %2020 = vmatprep.subr.bf16.mxu0 0
        %2021 = vmatpush1.bf16.msra.mxu0 0
        %2022 = vmatprep.mubr.bf16.mxu0 0
        %2023 = vmatmul.mubr.bf16.gmra.mrb[0].mxu0 %v1988
        %v2024 = vpop.f32.mrb[0].mxu0
        %v2025 = vadd.f32 0.0, %v2024
        %v2026 = vpop.f32.mrb[0].mxu0
        %v2027 = vpop.f32.mrb[0].mxu0
        %v2028 = vadd.f32 0.0, %v2027
        %v2029 = vpop.f32.mrb[0].mxu0
        %2030 = vdwg.mxu0
        %v2031 = vpack.c.bf16 %v1720, %v1717
        %v2032 = vpack.c.bf16 %v1764, %v1761
        %v2033 = vpack.c.bf16 %v1808, %v1805
        %v2034 = vpack.c.bf16 %v1852, %v1849
        %v2035 = vpack.c.bf16 %v1896, %v1893
        %v2036 = vpack.c.bf16 %v1940, %v1937
        %v2037 = vpack.c.bf16 %v1984, %v1981
        %v2038 = vpack.c.bf16 %v2028, %v2025
        %v2039 = vld [vmem:[%s4] sm:$0xf]
        %v2040 = vld [vmem:[%s4 + $0x4] sm:$0xf]
        %v2041 = vld [vmem:[%s5] sm:$0x1]
        %v2043 = vlaneseq
        %v2044 = vshrl.u32 %v2043, 7
        %v2045 = vsub.s32 0, %v2044
        %v2046 = vrot.slane %v2041, %v2045
        %v2050 = vunpack.c.l.b16 %v2039
        %v2051 = vunpack.c.l.b16 %v2040
        %v2052 = vpack.c.b16 %v2051, %v2050
        %v2055 = vsel %vm932, %v2031, 0
        %v2058 = vsel %vm932, %v2032, 0
        %v2061 = vsel %vm932, %v2033, 0
        %v2064 = vsel %vm932, %v2034, 0
        %v2067 = vsel %vm932, %v2035, 0
        %v2070 = vsel %vm932, %v2036, 0
        %v2073 = vsel %vm932, %v2037, 0
        %v2076 = vsel %vm932, %v2038, 0
        %2078 = vmatprep.subr.bf16.mxu0 0
        %2079 = vmatpush1.bf16.msra.mxu0 %v2052
        %2080 = vmatprep.subr.bf16.mxu0 0
        %2081 = vmatpush1.bf16.msra.mxu0 0
        %2082 = vmatprep.subr.bf16.mxu0 0
        %2083 = vmatpush1.bf16.msra.mxu0 0
        %2084 = vmatprep.subr.bf16.mxu0 0
        %2085 = vmatpush1.bf16.msra.mxu0 0
        %2086 = vmatprep.subr.bf16.mxu0 0
        %2087 = vmatpush1.bf16.msra.mxu0 0
        %2088 = vmatprep.subr.bf16.mxu0 0
        %2089 = vmatpush1.bf16.msra.mxu0 0
        %2090 = vmatprep.subr.bf16.mxu0 0
        %2091 = vmatpush1.bf16.msra.mxu0 0
        %2092 = vmatprep.subr.bf16.mxu0 0
        %2093 = vmatpush1.bf16.msra.mxu0 0
        %2094 = vmatprep.subr.bf16.mxu0 0
        %2095 = vmatpush1.bf16.msra.mxu0 0
        %2096 = vmatprep.subr.bf16.mxu0 0
        %2097 = vmatpush1.bf16.msra.mxu0 0
        %2098 = vmatprep.subr.bf16.mxu0 0
        %2099 = vmatpush1.bf16.msra.mxu0 0
        %2100 = vmatprep.subr.bf16.mxu0 0
        %2101 = vmatpush1.bf16.msra.mxu0 0
        %2102 = vmatprep.subr.bf16.mxu0 0
        %2103 = vmatpush1.bf16.msra.mxu0 0
        %2104 = vmatprep.subr.bf16.mxu0 0
        %2105 = vmatpush1.bf16.msra.mxu0 0
        %2106 = vmatprep.subr.bf16.mxu0 0
        %2107 = vmatpush1.bf16.msra.mxu0 0
        %2108 = vmatprep.subr.bf16.mxu0 0
        %2109 = vmatpush1.bf16.msra.mxu0 0
        %2110 = vmatprep.mubr.bf16.mxu0 0
        %2111 = vmatmul.mubr.bf16.gmra.mrb[0].mxu0 %v2055
        %v2112 = vpop.f32.mrb[0].mxu0
        %v2113 = vadd.f32 %v2046, %v2112
        %v2114 = vpop.f32.mrb[0].mxu0
        %v2115 = vpop.f32.mrb[0].mxu0
        %v2116 = vadd.f32 %v2046, %v2115
        %v2117 = vpop.f32.mrb[0].mxu0
        %2118 = vmatprep.mubr.bf16.mxu0 0
        %2119 = vmatmul.mubr.bf16.gmra.mrb[0].mxu0 %v2058
        %v2120 = vpop.f32.mrb[0].mxu0
        %v2121 = vadd.f32 %v2046, %v2120
        %v2122 = vpop.f32.mrb[0].mxu0
        %v2123 = vpop.f32.mrb[0].mxu0
        %v2124 = vadd.f32 %v2046, %v2123
        %v2125 = vpop.f32.mrb[0].mxu0
        %2126 = vmatprep.mubr.bf16.mxu0 0
        %2127 = vmatmul.mubr.bf16.gmra.mrb[0].mxu0 %v2061
        %v2128 = vpop.f32.mrb[0].mxu0
        %v2129 = vadd.f32 %v2046, %v2128
        %v2130 = vpop.f32.mrb[0].mxu0
        %v2131 = vpop.f32.mrb[0].mxu0
        %v2132 = vadd.f32 %v2046, %v2131
        %v2133 = vpop.f32.mrb[0].mxu0
        %2134 = vmatprep.mubr.bf16.mxu0 0
        %2135 = vmatmul.mubr.bf16.gmra.mrb[0].mxu0 %v2064
        %v2136 = vpop.f32.mrb[0].mxu0
        %v2137 = vadd.f32 %v2046, %v2136
        %v2138 = vpop.f32.mrb[0].mxu0
        %v2139 = vpop.f32.mrb[0].mxu0
        %v2140 = vadd.f32 %v2046, %v2139
        %v2141 = vpop.f32.mrb[0].mxu0
        %2142 = vmatprep.mubr.bf16.mxu0 0
        %2143 = vmatmul.mubr.bf16.gmra.mrb[0].mxu0 %v2067
        %v2144 = vpop.f32.mrb[0].mxu0
        %v2145 = vadd.f32 %v2046, %v2144
        %v2146 = vpop.f32.mrb[0].mxu0
        %v2147 = vpop.f32.mrb[0].mxu0
        %v2148 = vadd.f32 %v2046, %v2147
        %v2149 = vpop.f32.mrb[0].mxu0
        %2150 = vmatprep.mubr.bf16.mxu0 0
        %2151 = vmatmul.mubr.bf16.gmra.mrb[0].mxu0 %v2070
        %v2152 = vpop.f32.mrb[0].mxu0
        %v2153 = vadd.f32 %v2046, %v2152
        %v2154 = vpop.f32.mrb[0].mxu0
        %v2155 = vpop.f32.mrb[0].mxu0
        %v2156 = vadd.f32 %v2046, %v2155
        %v2157 = vpop.f32.mrb[0].mxu0
        %2158 = vmatprep.mubr.bf16.mxu0 0
        %2159 = vmatmul.mubr.bf16.gmra.mrb[0].mxu0 %v2073
        %v2160 = vpop.f32.mrb[0].mxu0
        %v2161 = vadd.f32 %v2046, %v2160
        %v2162 = vpop.f32.mrb[0].mxu0
        %v2163 = vpop.f32.mrb[0].mxu0
        %v2164 = vadd.f32 %v2046, %v2163
        %v2165 = vpop.f32.mrb[0].mxu0
        %2166 = vmatprep.mubr.bf16.mxu0 0
        %2167 = vmatmul.mubr.bf16.gmra.mrb[0].mxu0 %v2076
        %v2168 = vpop.f32.mrb[0].mxu0
        %v2169 = vadd.f32 %v2046, %v2168
        %v2170 = vpop.f32.mrb[0].mxu0
        %v2171 = vpop.f32.mrb[0].mxu0
        %v2172 = vadd.f32 %v2046, %v2171
        %v2173 = vpop.f32.mrb[0].mxu0
        %2174 = vdwg.mxu0
        %v2175 = vmax.f32 %v2113, 0.0
        %v2176 = vmax.f32 %v2116, 0.0
        %v2177 = vmax.f32 %v2121, 0.0
        %v2178 = vmax.f32 %v2124, 0.0
        %v2179 = vmax.f32 %v2129, 0.0
        %v2180 = vmax.f32 %v2132, 0.0
        %v2181 = vmax.f32 %v2137, 0.0
        %v2182 = vmax.f32 %v2140, 0.0
        %v2183 = vmax.f32 %v2145, 0.0
        %v2184 = vmax.f32 %v2148, 0.0
        %v2185 = vmax.f32 %v2153, 0.0
        %v2186 = vmax.f32 %v2156, 0.0
        %v2187 = vmax.f32 %v2161, 0.0
        %v2188 = vmax.f32 %v2164, 0.0
        %v2189 = vmax.f32 %v2169, 0.0
        %v2190 = vmax.f32 %v2172, 0.0
        %2191 = vxpose.xlu0.b32.start [1/16] %v2175, 128
        %2192 = vxpose.xlu0.b32.cont [2/16] %v2176, 128
        %2193 = vxpose.xlu0.b32.cont [3/16] 0.0, 128
        %2194 = vxpose.xlu0.b32.cont [4/16] 0.0, 128
        %2195 = vxpose.xlu0.b32.cont [5/16] 0.0, 128
        %2196 = vxpose.xlu0.b32.cont [6/16] 0.0, 128
        %2197 = vxpose.xlu0.b32.cont [7/16] 0.0, 128
        %2198 = vxpose.xlu0.b32.cont [8/16] 0.0, 128
        %2199 = vxpose.xlu0.b32.cont [9/16] 0.0, 128
        %2200 = vxpose.xlu0.b32.cont [10/16] 0.0, 128
        %2201 = vxpose.xlu0.b32.cont [11/16] 0.0, 128
        %2202 = vxpose.xlu0.b32.cont [12/16] 0.0, 128
        %2203 = vxpose.xlu0.b32.cont [13/16] 0.0, 128
        %2204 = vxpose.xlu0.b32.cont [14/16] 0.0, 128
        %2205 = vxpose.xlu0.b32.cont [15/16] 0.0, 128
        %2206 = vxpose.xlu0.b32.end [16/16] 0.0, 128
        %v2207 = vpop.trf.xlu0
        %v2208 = vpop.trf.xlu0
        %v2209 = vpop.trf.xlu0
        %v2210 = vpop.trf.xlu0
        %v2211 = vpop.trf.xlu0
        %v2212 = vpop.trf.xlu0
        %v2213 = vpop.trf.xlu0
        %v2214 = vpop.trf.xlu0
        %v2215 = vpop.trf.xlu0
        %v2216 = vpop.trf.xlu0
        %v2217 = vpop.trf.xlu0
        %v2218 = vpop.trf.xlu0
        %v2219 = vpop.trf.xlu0
        %v2220 = vpop.trf.xlu0
        %v2221 = vpop.trf.xlu0
        %v2222 = vpop.trf.xlu0
        %2223 = vxpose.xlu0.b32.start [1/16] %v2177, 128
        %2224 = vxpose.xlu0.b32.cont [2/16] %v2178, 128
        %2225 = vxpose.xlu0.b32.cont [3/16] 0.0, 128
        %2226 = vxpose.xlu0.b32.cont [4/16] 0.0, 128
        %2227 = vxpose.xlu0.b32.cont [5/16] 0.0, 128
        %2228 = vxpose.xlu0.b32.cont [6/16] 0.0, 128
        %2229 = vxpose.xlu0.b32.cont [7/16] 0.0, 128
        %2230 = vxpose.xlu0.b32.cont [8/16] 0.0, 128
        %2231 = vxpose.xlu0.b32.cont [9/16] 0.0, 128
        %2232 = vxpose.xlu0.b32.cont [10/16] 0.0, 128
        %2233 = vxpose.xlu0.b32.cont [11/16] 0.0, 128
        %2234 = vxpose.xlu0.b32.cont [12/16] 0.0, 128
        %2235 = vxpose.xlu0.b32.cont [13/16] 0.0, 128
        %2236 = vxpose.xlu0.b32.cont [14/16] 0.0, 128
        %2237 = vxpose.xlu0.b32.cont [15/16] 0.0, 128
        %2238 = vxpose.xlu0.b32.end [16/16] 0.0, 128
        %v2239 = vpop.trf.xlu0
        %v2240 = vpop.trf.xlu0
        %v2241 = vpop.trf.xlu0
        %v2242 = vpop.trf.xlu0
        %v2243 = vpop.trf.xlu0
        %v2244 = vpop.trf.xlu0
        %v2245 = vpop.trf.xlu0
        %v2246 = vpop.trf.xlu0
        %v2247 = vpop.trf.xlu0
        %v2248 = vpop.trf.xlu0
        %v2249 = vpop.trf.xlu0
        %v2250 = vpop.trf.xlu0
        %v2251 = vpop.trf.xlu0
        %v2252 = vpop.trf.xlu0
        %v2253 = vpop.trf.xlu0
        %v2254 = vpop.trf.xlu0
        %2255 = vxpose.xlu0.b32.start [1/16] %v2179, 128
        %2256 = vxpose.xlu0.b32.cont [2/16] %v2180, 128
        %2257 = vxpose.xlu0.b32.cont [3/16] 0.0, 128
        %2258 = vxpose.xlu0.b32.cont [4/16] 0.0, 128
        %2259 = vxpose.xlu0.b32.cont [5/16] 0.0, 128
        %2260 = vxpose.xlu0.b32.cont [6/16] 0.0, 128
        %2261 = vxpose.xlu0.b32.cont [7/16] 0.0, 128
        %2262 = vxpose.xlu0.b32.cont [8/16] 0.0, 128
        %2263 = vxpose.xlu0.b32.cont [9/16] 0.0, 128
        %2264 = vxpose.xlu0.b32.cont [10/16] 0.0, 128
        %2265 = vxpose.xlu0.b32.cont [11/16] 0.0, 128
        %2266 = vxpose.xlu0.b32.cont [12/16] 0.0, 128
        %2267 = vxpose.xlu0.b32.cont [13/16] 0.0, 128
        %2268 = vxpose.xlu0.b32.cont [14/16] 0.0, 128
        %2269 = vxpose.xlu0.b32.cont [15/16] 0.0, 128
        %2270 = vxpose.xlu0.b32.end [16/16] 0.0, 128
        %v2271 = vpop.trf.xlu0
        %v2272 = vpop.trf.xlu0
        %v2273 = vpop.trf.xlu0
        %v2274 = vpop.trf.xlu0
        %v2275 = vpop.trf.xlu0
        %v2276 = vpop.trf.xlu0
        %v2277 = vpop.trf.xlu0
        %v2278 = vpop.trf.xlu0
        %v2279 = vpop.trf.xlu0
        %v2280 = vpop.trf.xlu0
        %v2281 = vpop.trf.xlu0
        %v2282 = vpop.trf.xlu0
        %v2283 = vpop.trf.xlu0
        %v2284 = vpop.trf.xlu0
        %v2285 = vpop.trf.xlu0
        %v2286 = vpop.trf.xlu0
        %2287 = vxpose.xlu0.b32.start [1/16] %v2181, 128
        %2288 = vxpose.xlu0.b32.cont [2/16] %v2182, 128
        %2289 = vxpose.xlu0.b32.cont [3/16] 0.0, 128
        %2290 = vxpose.xlu0.b32.cont [4/16] 0.0, 128
        %2291 = vxpose.xlu0.b32.cont [5/16] 0.0, 128
        %2292 = vxpose.xlu0.b32.cont [6/16] 0.0, 128
        %2293 = vxpose.xlu0.b32.cont [7/16] 0.0, 128
        %2294 = vxpose.xlu0.b32.cont [8/16] 0.0, 128
        %2295 = vxpose.xlu0.b32.cont [9/16] 0.0, 128
        %2296 = vxpose.xlu0.b32.cont [10/16] 0.0, 128
        %2297 = vxpose.xlu0.b32.cont [11/16] 0.0, 128
        %2298 = vxpose.xlu0.b32.cont [12/16] 0.0, 128
        %2299 = vxpose.xlu0.b32.cont [13/16] 0.0, 128
        %2300 = vxpose.xlu0.b32.cont [14/16] 0.0, 128
        %2301 = vxpose.xlu0.b32.cont [15/16] 0.0, 128
        %2302 = vxpose.xlu0.b32.end [16/16] 0.0, 128
        %v2303 = vpop.trf.xlu0
        %v2304 = vpop.trf.xlu0
        %v2305 = vpop.trf.xlu0
        %v2306 = vpop.trf.xlu0
        %v2307 = vpop.trf.xlu0
        %v2308 = vpop.trf.xlu0
        %v2309 = vpop.trf.xlu0
        %v2310 = vpop.trf.xlu0
        %v2311 = vpop.trf.xlu0
        %v2312 = vpop.trf.xlu0
        %v2313 = vpop.trf.xlu0
        %v2314 = vpop.trf.xlu0
        %v2315 = vpop.trf.xlu0
        %v2316 = vpop.trf.xlu0
        %v2317 = vpop.trf.xlu0
        %v2318 = vpop.trf.xlu0
        %2319 = vxpose.xlu0.b32.start [1/16] %v2183, 128
        %2320 = vxpose.xlu0.b32.cont [2/16] %v2184, 128
        %2321 = vxpose.xlu0.b32.cont [3/16] 0.0, 128
        %2322 = vxpose.xlu0.b32.cont [4/16] 0.0, 128
        %2323 = vxpose.xlu0.b32.cont [5/16] 0.0, 128
        %2324 = vxpose.xlu0.b32.cont [6/16] 0.0, 128
        %2325 = vxpose.xlu0.b32.cont [7/16] 0.0, 128
        %2326 = vxpose.xlu0.b32.cont [8/16] 0.0, 128
        %2327 = vxpose.xlu0.b32.cont [9/16] 0.0, 128
        %2328 = vxpose.xlu0.b32.cont [10/16] 0.0, 128
        %2329 = vxpose.xlu0.b32.cont [11/16] 0.0, 128
        %2330 = vxpose.xlu0.b32.cont [12/16] 0.0, 128
        %2331 = vxpose.xlu0.b32.cont [13/16] 0.0, 128
        %2332 = vxpose.xlu0.b32.cont [14/16] 0.0, 128
        %2333 = vxpose.xlu0.b32.cont [15/16] 0.0, 128
        %2334 = vxpose.xlu0.b32.end [16/16] 0.0, 128
        %v2335 = vpop.trf.xlu0
        %v2336 = vpop.trf.xlu0
        %v2337 = vpop.trf.xlu0
        %v2338 = vpop.trf.xlu0
        %v2339 = vpop.trf.xlu0
        %v2340 = vpop.trf.xlu0
        %v2341 = vpop.trf.xlu0
        %v2342 = vpop.trf.xlu0
        %v2343 = vpop.trf.xlu0
        %v2344 = vpop.trf.xlu0
        %v2345 = vpop.trf.xlu0
        %v2346 = vpop.trf.xlu0
        %v2347 = vpop.trf.xlu0
        %v2348 = vpop.trf.xlu0
        %v2349 = vpop.trf.xlu0
        %v2350 = vpop.trf.xlu0
        %2351 = vxpose.xlu0.b32.start [1/16] %v2185, 128
        %2352 = vxpose.xlu0.b32.cont [2/16] %v2186, 128
        %2353 = vxpose.xlu0.b32.cont [3/16] 0.0, 128
        %2354 = vxpose.xlu0.b32.cont [4/16] 0.0, 128
        %2355 = vxpose.xlu0.b32.cont [5/16] 0.0, 128
        %2356 = vxpose.xlu0.b32.cont [6/16] 0.0, 128
        %2357 = vxpose.xlu0.b32.cont [7/16] 0.0, 128
        %2358 = vxpose.xlu0.b32.cont [8/16] 0.0, 128
        %2359 = vxpose.xlu0.b32.cont [9/16] 0.0, 128
        %2360 = vxpose.xlu0.b32.cont [10/16] 0.0, 128
        %2361 = vxpose.xlu0.b32.cont [11/16] 0.0, 128
        %2362 = vxpose.xlu0.b32.cont [12/16] 0.0, 128
        %2363 = vxpose.xlu0.b32.cont [13/16] 0.0, 128
        %2364 = vxpose.xlu0.b32.cont [14/16] 0.0, 128
        %2365 = vxpose.xlu0.b32.cont [15/16] 0.0, 128
        %2366 = vxpose.xlu0.b32.end [16/16] 0.0, 128
        %v2367 = vpop.trf.xlu0
        %v2368 = vpop.trf.xlu0
        %v2369 = vpop.trf.xlu0
        %v2370 = vpop.trf.xlu0
        %v2371 = vpop.trf.xlu0
        %v2372 = vpop.trf.xlu0
        %v2373 = vpop.trf.xlu0
        %v2374 = vpop.trf.xlu0
        %v2375 = vpop.trf.xlu0
        %v2376 = vpop.trf.xlu0
        %v2377 = vpop.trf.xlu0
        %v2378 = vpop.trf.xlu0
        %v2379 = vpop.trf.xlu0
        %v2380 = vpop.trf.xlu0
        %v2381 = vpop.trf.xlu0
        %v2382 = vpop.trf.xlu0
        %2383 = vxpose.xlu0.b32.start [1/16] %v2187, 128
        %2384 = vxpose.xlu0.b32.cont [2/16] %v2188, 128
        %2385 = vxpose.xlu0.b32.cont [3/16] 0.0, 128
        %2386 = vxpose.xlu0.b32.cont [4/16] 0.0, 128
        %2387 = vxpose.xlu0.b32.cont [5/16] 0.0, 128
        %2388 = vxpose.xlu0.b32.cont [6/16] 0.0, 128
        %2389 = vxpose.xlu0.b32.cont [7/16] 0.0, 128
        %2390 = vxpose.xlu0.b32.cont [8/16] 0.0, 128
        %2391 = vxpose.xlu0.b32.cont [9/16] 0.0, 128
        %2392 = vxpose.xlu0.b32.cont [10/16] 0.0, 128
        %2393 = vxpose.xlu0.b32.cont [11/16] 0.0, 128
        %2394 = vxpose.xlu0.b32.cont [12/16] 0.0, 128
        %2395 = vxpose.xlu0.b32.cont [13/16] 0.0, 128
        %2396 = vxpose.xlu0.b32.cont [14/16] 0.0, 128
        %2397 = vxpose.xlu0.b32.cont [15/16] 0.0, 128
        %2398 = vxpose.xlu0.b32.end [16/16] 0.0, 128
        %v2399 = vpop.trf.xlu0
        %v2400 = vpop.trf.xlu0
        %v2401 = vpop.trf.xlu0
        %v2402 = vpop.trf.xlu0
        %v2403 = vpop.trf.xlu0
        %v2404 = vpop.trf.xlu0
        %v2405 = vpop.trf.xlu0
        %v2406 = vpop.trf.xlu0
        %v2407 = vpop.trf.xlu0
        %v2408 = vpop.trf.xlu0
        %v2409 = vpop.trf.xlu0
        %v2410 = vpop.trf.xlu0
        %v2411 = vpop.trf.xlu0
        %v2412 = vpop.trf.xlu0
        %v2413 = vpop.trf.xlu0
        %v2414 = vpop.trf.xlu0
        %2415 = vxpose.xlu0.b32.start [1/16] %v2189, 128
        %2416 = vxpose.xlu0.b32.cont [2/16] %v2190, 128
        %2417 = vxpose.xlu0.b32.cont [3/16] 0.0, 128
        %2418 = vxpose.xlu0.b32.cont [4/16] 0.0, 128
        %2419 = vxpose.xlu0.b32.cont [5/16] 0.0, 128
        %2420 = vxpose.xlu0.b32.cont [6/16] 0.0, 128
        %2421 = vxpose.xlu0.b32.cont [7/16] 0.0, 128
        %2422 = vxpose.xlu0.b32.cont [8/16] 0.0, 128
        %2423 = vxpose.xlu0.b32.cont [9/16] 0.0, 128
        %2424 = vxpose.xlu0.b32.cont [10/16] 0.0, 128
        %2425 = vxpose.xlu0.b32.cont [11/16] 0.0, 128
        %2426 = vxpose.xlu0.b32.cont [12/16] 0.0, 128
        %2427 = vxpose.xlu0.b32.cont [13/16] 0.0, 128
        %2428 = vxpose.xlu0.b32.cont [14/16] 0.0, 128
        %2429 = vxpose.xlu0.b32.cont [15/16] 0.0, 128
        %2430 = vxpose.xlu0.b32.end [16/16] 0.0, 128
        %v2431 = vpop.trf.xlu0
        %v2432 = vpop.trf.xlu0
        %v2433 = vpop.trf.xlu0
        %v2434 = vpop.trf.xlu0
        %v2435 = vpop.trf.xlu0
        %v2436 = vpop.trf.xlu0
        %v2437 = vpop.trf.xlu0
        %v2438 = vpop.trf.xlu0
        %v2439 = vpop.trf.xlu0
        %v2440 = vpop.trf.xlu0
        %v2441 = vpop.trf.xlu0
        %v2442 = vpop.trf.xlu0
        %v2443 = vpop.trf.xlu0
        %v2444 = vpop.trf.xlu0
        %v2445 = vpop.trf.xlu0
        %v2446 = vpop.trf.xlu0
        %v2447 = vld [vmem:[%s298] sm:$0xff]
        %v2448 = vld [vmem:[%s298 + $0x8] sm:$0xff]
        %2450 = vrot.lane.b32.xlu0 %v2447, 112
        %v2451 = vpop.permute.xlu0 %2450
        %2453 = vrot.lane.b32.xlu0 %v2447, 96
        %v2454 = vpop.permute.xlu0 %2453
        %2456 = vrot.lane.b32.xlu0 %v2447, 80
        %v2457 = vpop.permute.xlu0 %2456
        %2459 = vrot.lane.b32.xlu0 %v2447, 64
        %v2460 = vpop.permute.xlu0 %2459
        %2462 = vrot.lane.b32.xlu0 %v2447, 48
        %v2463 = vpop.permute.xlu0 %2462
        %2465 = vrot.lane.b32.xlu0 %v2447, 32
        %v2466 = vpop.permute.xlu0 %2465
        %2468 = vrot.lane.b32.xlu0 %v2447, 16
        %v2469 = vpop.permute.xlu0 %2468
        %2472 = vrot.lane.b32.xlu0 %v2448, 112
        %v2473 = vpop.permute.xlu0 %2472
        %2475 = vrot.lane.b32.xlu0 %v2448, 96
        %v2476 = vpop.permute.xlu0 %2475
        %2478 = vrot.lane.b32.xlu0 %v2448, 80
        %v2479 = vpop.permute.xlu0 %2478
        %2481 = vrot.lane.b32.xlu0 %v2448, 64
        %v2482 = vpop.permute.xlu0 %2481
        %2484 = vrot.lane.b32.xlu0 %v2448, 48
        %v2485 = vpop.permute.xlu0 %2484
        %2487 = vrot.lane.b32.xlu0 %v2448, 32
        %v2488 = vpop.permute.xlu0 %2487
        %2490 = vrot.lane.b32.xlu0 %v2448, 16
        %v2491 = vpop.permute.xlu0 %2490
        %v2493 = vcombine.low %v2447, %v2454
        %v2494 = vcombine.high %v2447, %v2454
        %v2496 = vunpack.c.l.s4 1983009808
        %v2497 = vunpack.c.0.s8 %v2496
        %v2498 = vlaneseq
        %v2499 = vshrl.u32 %v2498, 7
        %v2500 = vsub.s32 %v2497, %v2499
        %v2501 = vrot.slane %v2493, %v2500
        %v2503 = vunpack.c.l.s4 1983009808
        %v2504 = vunpack.c.0.s8 %v2503
        %v2505 = vlaneseq
        %v2506 = vshrl.u32 %v2505, 7
        %v2507 = vsub.s32 %v2504, %v2506
        %v2508 = vrot.slane %v2494, %v2507
        %v2509 = vcombine.low %v2451, %v2457
        %v2510 = vcombine.high %v2451, %v2457
        %v2512 = vunpack.c.l.s4 1983009808
        %v2513 = vunpack.c.0.s8 %v2512
        %v2514 = vlaneseq
        %v2515 = vshrl.u32 %v2514, 7
        %v2516 = vsub.s32 %v2513, %v2515
        %v2517 = vrot.slane %v2509, %v2516
        %v2519 = vunpack.c.l.s4 1983009808
        %v2520 = vunpack.c.0.s8 %v2519
        %v2521 = vlaneseq
        %v2522 = vshrl.u32 %v2521, 7
        %v2523 = vsub.s32 %v2520, %v2522
        %v2524 = vrot.slane %v2510, %v2523
        %v2525 = vcombine.low %v2460, %v2466
        %v2526 = vcombine.high %v2460, %v2466
        %v2528 = vunpack.c.l.s4 1983009808
        %v2529 = vunpack.c.0.s8 %v2528
        %v2530 = vlaneseq
        %v2531 = vshrl.u32 %v2530, 7
        %v2532 = vsub.s32 %v2529, %v2531
        %v2533 = vrot.slane %v2525, %v2532
        %v2535 = vunpack.c.l.s4 1983009808
        %v2536 = vunpack.c.0.s8 %v2535
        %v2537 = vlaneseq
        %v2538 = vshrl.u32 %v2537, 7
        %v2539 = vsub.s32 %v2536, %v2538
        %v2540 = vrot.slane %v2526, %v2539
        %v2541 = vcombine.low %v2463, %v2469
        %v2542 = vcombine.high %v2463, %v2469
        %v2544 = vunpack.c.l.s4 1983009808
        %v2545 = vunpack.c.0.s8 %v2544
        %v2546 = vlaneseq
        %v2547 = vshrl.u32 %v2546, 7
        %v2548 = vsub.s32 %v2545, %v2547
        %v2549 = vrot.slane %v2541, %v2548
        %v2551 = vunpack.c.l.s4 1983009808
        %v2552 = vunpack.c.0.s8 %v2551
        %v2553 = vlaneseq
        %v2554 = vshrl.u32 %v2553, 7
        %v2555 = vsub.s32 %v2552, %v2554
        %v2556 = vrot.slane %v2542, %v2555
        %v2557 = vcombine.low %v2501, %v2517
        %v2558 = vcombine.high %v2501, %v2517
        %v2560 = vunpack.c.l.s4 1934713408
        %v2561 = vunpack.c.0.s8 %v2560
        %v2562 = vlaneseq
        %v2563 = vshrl.u32 %v2562, 7
        %v2564 = vsub.s32 %v2561, %v2563
        %v2565 = vrot.slane %v2557, %v2564
        %v2567 = vunpack.c.l.s4 1934713408
        %v2568 = vunpack.c.0.s8 %v2567
        %v2569 = vlaneseq
        %v2570 = vshrl.u32 %v2569, 7
        %v2571 = vsub.s32 %v2568, %v2570
        %v2572 = vrot.slane %v2558, %v2571
        %v2573 = vcombine.low %v2508, %v2524
        %v2574 = vcombine.high %v2508, %v2524
        %v2576 = vunpack.c.l.s4 1934713408
        %v2577 = vunpack.c.0.s8 %v2576
        %v2578 = vlaneseq
        %v2579 = vshrl.u32 %v2578, 7
        %v2580 = vsub.s32 %v2577, %v2579
        %v2581 = vrot.slane %v2573, %v2580
        %v2583 = vunpack.c.l.s4 1934713408
        %v2584 = vunpack.c.0.s8 %v2583
        %v2585 = vlaneseq
        %v2586 = vshrl.u32 %v2585, 7
        %v2587 = vsub.s32 %v2584, %v2586
        %v2588 = vrot.slane %v2574, %v2587
        %v2589 = vcombine.low %v2533, %v2549
        %v2590 = vcombine.high %v2533, %v2549
        %v2592 = vunpack.c.l.s4 1934713408
        %v2593 = vunpack.c.0.s8 %v2592
        %v2594 = vlaneseq
        %v2595 = vshrl.u32 %v2594, 7
        %v2596 = vsub.s32 %v2593, %v2595
        %v2597 = vrot.slane %v2589, %v2596
        %v2599 = vunpack.c.l.s4 1934713408
        %v2600 = vunpack.c.0.s8 %v2599
        %v2601 = vlaneseq
        %v2602 = vshrl.u32 %v2601, 7
        %v2603 = vsub.s32 %v2600, %v2602
        %v2604 = vrot.slane %v2590, %v2603
        %v2605 = vcombine.low %v2540, %v2556
        %v2606 = vcombine.high %v2540, %v2556
        %v2608 = vunpack.c.l.s4 1934713408
        %v2609 = vunpack.c.0.s8 %v2608
        %v2610 = vlaneseq
        %v2611 = vshrl.u32 %v2610, 7
        %v2612 = vsub.s32 %v2609, %v2611
        %v2613 = vrot.slane %v2605, %v2612
        %v2615 = vunpack.c.l.s4 1934713408
        %v2616 = vunpack.c.0.s8 %v2615
        %v2617 = vlaneseq
        %v2618 = vshrl.u32 %v2617, 7
        %v2619 = vsub.s32 %v2616, %v2618
        %v2620 = vrot.slane %v2606, %v2619
        %v2621 = vcombine.low %v2565, %v2597
        %v2622 = vcombine.high %v2565, %v2597
        %v2623 = vcombine.low %v2572, %v2604
        %v2624 = vcombine.high %v2572, %v2604
        %v2625 = vcombine.low %v2581, %v2613
        %v2626 = vcombine.high %v2581, %v2613
        %v2627 = vcombine.low %v2588, %v2620
        %v2628 = vcombine.high %v2588, %v2620
        %v2629 = vcombine.low %v2448, %v2476
        %v2630 = vcombine.high %v2448, %v2476
        %v2632 = vunpack.c.l.s4 1983009808
        %v2633 = vunpack.c.0.s8 %v2632
        %v2634 = vlaneseq
        %v2635 = vshrl.u32 %v2634, 7
        %v2636 = vsub.s32 %v2633, %v2635
        %v2637 = vrot.slane %v2629, %v2636
        %v2639 = vunpack.c.l.s4 1983009808
        %v2640 = vunpack.c.0.s8 %v2639
        %v2641 = vlaneseq
        %v2642 = vshrl.u32 %v2641, 7
        %v2643 = vsub.s32 %v2640, %v2642
        %v2644 = vrot.slane %v2630, %v2643
        %v2645 = vcombine.low %v2473, %v2479
        %v2646 = vcombine.high %v2473, %v2479
        %v2648 = vunpack.c.l.s4 1983009808
        %v2649 = vunpack.c.0.s8 %v2648
        %v2650 = vlaneseq
        %v2651 = vshrl.u32 %v2650, 7
        %v2652 = vsub.s32 %v2649, %v2651
        %v2653 = vrot.slane %v2645, %v2652
        %v2655 = vunpack.c.l.s4 1983009808
        %v2656 = vunpack.c.0.s8 %v2655
        %v2657 = vlaneseq
        %v2658 = vshrl.u32 %v2657, 7
        %v2659 = vsub.s32 %v2656, %v2658
        %v2660 = vrot.slane %v2646, %v2659
        %v2661 = vcombine.low %v2482, %v2488
        %v2662 = vcombine.high %v2482, %v2488
        %v2664 = vunpack.c.l.s4 1983009808
        %v2665 = vunpack.c.0.s8 %v2664
        %v2666 = vlaneseq
        %v2667 = vshrl.u32 %v2666, 7
        %v2668 = vsub.s32 %v2665, %v2667
        %v2669 = vrot.slane %v2661, %v2668
        %v2671 = vunpack.c.l.s4 1983009808
        %v2672 = vunpack.c.0.s8 %v2671
        %v2673 = vlaneseq
        %v2674 = vshrl.u32 %v2673, 7
        %v2675 = vsub.s32 %v2672, %v2674
        %v2676 = vrot.slane %v2662, %v2675
        %v2677 = vcombine.low %v2485, %v2491
        %v2678 = vcombine.high %v2485, %v2491
        %v2680 = vunpack.c.l.s4 1983009808
        %v2681 = vunpack.c.0.s8 %v2680
        %v2682 = vlaneseq
        %v2683 = vshrl.u32 %v2682, 7
        %v2684 = vsub.s32 %v2681, %v2683
        %v2685 = vrot.slane %v2677, %v2684
        %v2687 = vunpack.c.l.s4 1983009808
        %v2688 = vunpack.c.0.s8 %v2687
        %v2689 = vlaneseq
        %v2690 = vshrl.u32 %v2689, 7
        %v2691 = vsub.s32 %v2688, %v2690
        %v2692 = vrot.slane %v2678, %v2691
        %v2693 = vcombine.low %v2637, %v2653
        %v2694 = vcombine.high %v2637, %v2653
        %v2696 = vunpack.c.l.s4 1934713408
        %v2697 = vunpack.c.0.s8 %v2696
        %v2698 = vlaneseq
        %v2699 = vshrl.u32 %v2698, 7
        %v2700 = vsub.s32 %v2697, %v2699
        %v2701 = vrot.slane %v2693, %v2700
        %v2703 = vunpack.c.l.s4 1934713408
        %v2704 = vunpack.c.0.s8 %v2703
        %v2705 = vlaneseq
        %v2706 = vshrl.u32 %v2705, 7
        %v2707 = vsub.s32 %v2704, %v2706
        %v2708 = vrot.slane %v2694, %v2707
        %v2709 = vcombine.low %v2644, %v2660
        %v2710 = vcombine.high %v2644, %v2660
        %v2712 = vunpack.c.l.s4 1934713408
        %v2713 = vunpack.c.0.s8 %v2712
        %v2714 = vlaneseq
        %v2715 = vshrl.u32 %v2714, 7
        %v2716 = vsub.s32 %v2713, %v2715
        %v2717 = vrot.slane %v2709, %v2716
        %v2719 = vunpack.c.l.s4 1934713408
        %v2720 = vunpack.c.0.s8 %v2719
        %v2721 = vlaneseq
        %v2722 = vshrl.u32 %v2721, 7
        %v2723 = vsub.s32 %v2720, %v2722
        %v2724 = vrot.slane %v2710, %v2723
        %v2725 = vcombine.low %v2669, %v2685
        %v2726 = vcombine.high %v2669, %v2685
        %v2728 = vunpack.c.l.s4 1934713408
        %v2729 = vunpack.c.0.s8 %v2728
        %v2730 = vlaneseq
        %v2731 = vshrl.u32 %v2730, 7
        %v2732 = vsub.s32 %v2729, %v2731
        %v2733 = vrot.slane %v2725, %v2732
        %v2735 = vunpack.c.l.s4 1934713408
        %v2736 = vunpack.c.0.s8 %v2735
        %v2737 = vlaneseq
        %v2738 = vshrl.u32 %v2737, 7
        %v2739 = vsub.s32 %v2736, %v2738
        %v2740 = vrot.slane %v2726, %v2739
        %v2741 = vcombine.low %v2676, %v2692
        %v2742 = vcombine.high %v2676, %v2692
        %v2744 = vunpack.c.l.s4 1934713408
        %v2745 = vunpack.c.0.s8 %v2744
        %v2746 = vlaneseq
        %v2747 = vshrl.u32 %v2746, 7
        %v2748 = vsub.s32 %v2745, %v2747
        %v2749 = vrot.slane %v2741, %v2748
        %v2751 = vunpack.c.l.s4 1934713408
        %v2752 = vunpack.c.0.s8 %v2751
        %v2753 = vlaneseq
        %v2754 = vshrl.u32 %v2753, 7
        %v2755 = vsub.s32 %v2752, %v2754
        %v2756 = vrot.slane %v2742, %v2755
        %v2757 = vcombine.low %v2701, %v2733
        %v2758 = vcombine.high %v2701, %v2733
        %v2759 = vcombine.low %v2708, %v2740
        %v2760 = vcombine.high %v2708, %v2740
        %v2761 = vcombine.low %v2717, %v2749
        %v2762 = vcombine.high %v2717, %v2749
        %v2763 = vcombine.low %v2724, %v2756
        %v2764 = vcombine.high %v2724, %v2756
        %s2765 = sld [smem:[#allocation2]]
        %v2766 = vstv %s2765
        %v2767 = vmul.f32 %v2766, %v2207
        %v2768 = vmul.f32 %v2766, %v2208
        %v2769 = vmul.f32 %v2766, %v2239
        %v2770 = vmul.f32 %v2766, %v2240
        %v2771 = vmul.f32 %v2766, %v2271
        %v2772 = vmul.f32 %v2766, %v2272
        %v2773 = vmul.f32 %v2766, %v2303
        %v2774 = vmul.f32 %v2766, %v2304
        %v2775 = vmul.f32 %v2766, %v2335
        %v2776 = vmul.f32 %v2766, %v2336
        %v2777 = vmul.f32 %v2766, %v2367
        %v2778 = vmul.f32 %v2766, %v2368
        %v2779 = vmul.f32 %v2766, %v2399
        %v2780 = vmul.f32 %v2766, %v2400
        %v2781 = vmul.f32 %v2766, %v2431
        %v2782 = vmul.f32 %v2766, %v2432
        %v2783 = vadd.f32 %v2621, %v2767
        %v2784 = vadd.f32 %v2757, %v2768
        %v2785 = vadd.f32 %v2622, %v2769
        %v2786 = vadd.f32 %v2758, %v2770
        %v2787 = vadd.f32 %v2623, %v2771
        %v2788 = vadd.f32 %v2759, %v2772
        %v2789 = vadd.f32 %v2624, %v2773
        %v2790 = vadd.f32 %v2760, %v2774
        %v2791 = vadd.f32 %v2625, %v2775
        %v2792 = vadd.f32 %v2761, %v2776
        %v2793 = vadd.f32 %v2626, %v2777
        %v2794 = vadd.f32 %v2762, %v2778
        %v2795 = vadd.f32 %v2627, %v2779
        %v2796 = vadd.f32 %v2763, %v2780
        %v2797 = vadd.f32 %v2628, %v2781
        %v2798 = vadd.f32 %v2764, %v2782
        %v2799 = vcombine.low %v2783, %v2787
        %v2800 = vcombine.high %v2783, %v2787
        %v2802 = vunpack.c.l.s4 1983009808
        %v2803 = vunpack.c.0.s8 %v2802
        %v2804 = vlaneseq
        %v2805 = vshrl.u32 %v2804, 7
        %v2806 = vsub.s32 %v2803, %v2805
        %v2807 = vrot.slane %v2799, %v2806
        %v2809 = vunpack.c.l.s4 1983009808
        %v2810 = vunpack.c.0.s8 %v2809
        %v2811 = vlaneseq
        %v2812 = vshrl.u32 %v2811, 7
        %v2813 = vsub.s32 %v2810, %v2812
        %v2814 = vrot.slane %v2800, %v2813
        %v2815 = vcombine.low %v2785, %v2789
        %v2816 = vcombine.high %v2785, %v2789
        %v2818 = vunpack.c.l.s4 1983009808
        %v2819 = vunpack.c.0.s8 %v2818
        %v2820 = vlaneseq
        %v2821 = vshrl.u32 %v2820, 7
        %v2822 = vsub.s32 %v2819, %v2821
        %v2823 = vrot.slane %v2815, %v2822
        %v2825 = vunpack.c.l.s4 1983009808
        %v2826 = vunpack.c.0.s8 %v2825
        %v2827 = vlaneseq
        %v2828 = vshrl.u32 %v2827, 7
        %v2829 = vsub.s32 %v2826, %v2828
        %v2830 = vrot.slane %v2816, %v2829
        %v2831 = vcombine.low %v2791, %v2795
        %v2832 = vcombine.high %v2791, %v2795
        %v2834 = vunpack.c.l.s4 1983009808
        %v2835 = vunpack.c.0.s8 %v2834
        %v2836 = vlaneseq
        %v2837 = vshrl.u32 %v2836, 7
        %v2838 = vsub.s32 %v2835, %v2837
        %v2839 = vrot.slane %v2831, %v2838
        %v2841 = vunpack.c.l.s4 1983009808
        %v2842 = vunpack.c.0.s8 %v2841
        %v2843 = vlaneseq
        %v2844 = vshrl.u32 %v2843, 7
        %v2845 = vsub.s32 %v2842, %v2844
        %v2846 = vrot.slane %v2832, %v2845
        %v2847 = vcombine.low %v2793, %v2797
        %v2848 = vcombine.high %v2793, %v2797
        %v2850 = vunpack.c.l.s4 1983009808
        %v2851 = vunpack.c.0.s8 %v2850
        %v2852 = vlaneseq
        %v2853 = vshrl.u32 %v2852, 7
        %v2854 = vsub.s32 %v2851, %v2853
        %v2855 = vrot.slane %v2847, %v2854
        %v2857 = vunpack.c.l.s4 1983009808
        %v2858 = vunpack.c.0.s8 %v2857
        %v2859 = vlaneseq
        %v2860 = vshrl.u32 %v2859, 7
        %v2861 = vsub.s32 %v2858, %v2860
        %v2862 = vrot.slane %v2848, %v2861
        %v2863 = vcombine.low %v2807, %v2823
        %v2864 = vcombine.high %v2807, %v2823
        %v2866 = vunpack.c.l.s4 1934713408
        %v2867 = vunpack.c.0.s8 %v2866
        %v2868 = vlaneseq
        %v2869 = vshrl.u32 %v2868, 7
        %v2870 = vsub.s32 %v2867, %v2869
        %v2871 = vrot.slane %v2863, %v2870
        %v2873 = vunpack.c.l.s4 1934713408
        %v2874 = vunpack.c.0.s8 %v2873
        %v2875 = vlaneseq
        %v2876 = vshrl.u32 %v2875, 7
        %v2877 = vsub.s32 %v2874, %v2876
        %v2878 = vrot.slane %v2864, %v2877
        %v2879 = vcombine.low %v2814, %v2830
        %v2880 = vcombine.high %v2814, %v2830
        %v2882 = vunpack.c.l.s4 1934713408
        %v2883 = vunpack.c.0.s8 %v2882
        %v2884 = vlaneseq
        %v2885 = vshrl.u32 %v2884, 7
        %v2886 = vsub.s32 %v2883, %v2885
        %v2887 = vrot.slane %v2879, %v2886
        %v2889 = vunpack.c.l.s4 1934713408
        %v2890 = vunpack.c.0.s8 %v2889
        %v2891 = vlaneseq
        %v2892 = vshrl.u32 %v2891, 7
        %v2893 = vsub.s32 %v2890, %v2892
        %v2894 = vrot.slane %v2880, %v2893
        %v2895 = vcombine.low %v2839, %v2855
        %v2896 = vcombine.high %v2839, %v2855
        %v2898 = vunpack.c.l.s4 1934713408
        %v2899 = vunpack.c.0.s8 %v2898
        %v2900 = vlaneseq
        %v2901 = vshrl.u32 %v2900, 7
        %v2902 = vsub.s32 %v2899, %v2901
        %v2903 = vrot.slane %v2895, %v2902
        %v2905 = vunpack.c.l.s4 1934713408
        %v2906 = vunpack.c.0.s8 %v2905
        %v2907 = vlaneseq
        %v2908 = vshrl.u32 %v2907, 7
        %v2909 = vsub.s32 %v2906, %v2908
        %v2910 = vrot.slane %v2896, %v2909
        %v2911 = vcombine.low %v2846, %v2862
        %v2912 = vcombine.high %v2846, %v2862
        %v2914 = vunpack.c.l.s4 1934713408
        %v2915 = vunpack.c.0.s8 %v2914
        %v2916 = vlaneseq
        %v2917 = vshrl.u32 %v2916, 7
        %v2918 = vsub.s32 %v2915, %v2917
        %v2919 = vrot.slane %v2911, %v2918
        %v2921 = vunpack.c.l.s4 1934713408
        %v2922 = vunpack.c.0.s8 %v2921
        %v2923 = vlaneseq
        %v2924 = vshrl.u32 %v2923, 7
        %v2925 = vsub.s32 %v2922, %v2924
        %v2926 = vrot.slane %v2912, %v2925
        %v2927 = vcombine.low %v2871, %v2903
        %v2928 = vcombine.high %v2871, %v2903
        %v2929 = vcombine.low %v2878, %v2910
        %v2930 = vcombine.high %v2878, %v2910
        %v2931 = vcombine.low %v2887, %v2919
        %v2932 = vcombine.high %v2887, %v2919
        %v2933 = vcombine.low %v2894, %v2926
        %v2934 = vcombine.high %v2894, %v2926
        %v2935 = vcombine.low %v2784, %v2788
        %v2936 = vcombine.high %v2784, %v2788
        %v2938 = vunpack.c.l.s4 1983009808
        %v2939 = vunpack.c.0.s8 %v2938
        %v2940 = vlaneseq
        %v2941 = vshrl.u32 %v2940, 7
        %v2942 = vsub.s32 %v2939, %v2941
        %v2943 = vrot.slane %v2935, %v2942
        %v2945 = vunpack.c.l.s4 1983009808
        %v2946 = vunpack.c.0.s8 %v2945
        %v2947 = vlaneseq
        %v2948 = vshrl.u32 %v2947, 7
        %v2949 = vsub.s32 %v2946, %v2948
        %v2950 = vrot.slane %v2936, %v2949
        %v2951 = vcombine.low %v2786, %v2790
        %v2952 = vcombine.high %v2786, %v2790
        %v2954 = vunpack.c.l.s4 1983009808
        %v2955 = vunpack.c.0.s8 %v2954
        %v2956 = vlaneseq
        %v2957 = vshrl.u32 %v2956, 7
        %v2958 = vsub.s32 %v2955, %v2957
        %v2959 = vrot.slane %v2951, %v2958
        %v2961 = vunpack.c.l.s4 1983009808
        %v2962 = vunpack.c.0.s8 %v2961
        %v2963 = vlaneseq
        %v2964 = vshrl.u32 %v2963, 7
        %v2965 = vsub.s32 %v2962, %v2964
        %v2966 = vrot.slane %v2952, %v2965
        %v2967 = vcombine.low %v2792, %v2796
        %v2968 = vcombine.high %v2792, %v2796
        %v2970 = vunpack.c.l.s4 1983009808
        %v2971 = vunpack.c.0.s8 %v2970
        %v2972 = vlaneseq
        %v2973 = vshrl.u32 %v2972, 7
        %v2974 = vsub.s32 %v2971, %v2973
        %v2975 = vrot.slane %v2967, %v2974
        %v2977 = vunpack.c.l.s4 1983009808
        %v2978 = vunpack.c.0.s8 %v2977
        %v2979 = vlaneseq
        %v2980 = vshrl.u32 %v2979, 7
        %v2981 = vsub.s32 %v2978, %v2980
        %v2982 = vrot.slane %v2968, %v2981
        %v2983 = vcombine.low %v2794, %v2798
        %v2984 = vcombine.high %v2794, %v2798
        %v2986 = vunpack.c.l.s4 1983009808
        %v2987 = vunpack.c.0.s8 %v2986
        %v2988 = vlaneseq
        %v2989 = vshrl.u32 %v2988, 7
        %v2990 = vsub.s32 %v2987, %v2989
        %v2991 = vrot.slane %v2983, %v2990
        %v2993 = vunpack.c.l.s4 1983009808
        %v2994 = vunpack.c.0.s8 %v2993
        %v2995 = vlaneseq
        %v2996 = vshrl.u32 %v2995, 7
        %v2997 = vsub.s32 %v2994, %v2996
        %v2998 = vrot.slane %v2984, %v2997
        %v2999 = vcombine.low %v2943, %v2959
        %v3000 = vcombine.high %v2943, %v2959
        %v3002 = vunpack.c.l.s4 1934713408
        %v3003 = vunpack.c.0.s8 %v3002
        %v3004 = vlaneseq
        %v3005 = vshrl.u32 %v3004, 7
        %v3006 = vsub.s32 %v3003, %v3005
        %v3007 = vrot.slane %v2999, %v3006
        %v3009 = vunpack.c.l.s4 1934713408
        %v3010 = vunpack.c.0.s8 %v3009
        %v3011 = vlaneseq
        %v3012 = vshrl.u32 %v3011, 7
        %v3013 = vsub.s32 %v3010, %v3012
        %v3014 = vrot.slane %v3000, %v3013
        %v3015 = vcombine.low %v2950, %v2966
        %v3016 = vcombine.high %v2950, %v2966
        %v3018 = vunpack.c.l.s4 1934713408
        %v3019 = vunpack.c.0.s8 %v3018
        %v3020 = vlaneseq
        %v3021 = vshrl.u32 %v3020, 7
        %v3022 = vsub.s32 %v3019, %v3021
        %v3023 = vrot.slane %v3015, %v3022
        %v3025 = vunpack.c.l.s4 1934713408
        %v3026 = vunpack.c.0.s8 %v3025
        %v3027 = vlaneseq
        %v3028 = vshrl.u32 %v3027, 7
        %v3029 = vsub.s32 %v3026, %v3028
        %v3030 = vrot.slane %v3016, %v3029
        %v3031 = vcombine.low %v2975, %v2991
        %v3032 = vcombine.high %v2975, %v2991
        %v3034 = vunpack.c.l.s4 1934713408
        %v3035 = vunpack.c.0.s8 %v3034
        %v3036 = vlaneseq
        %v3037 = vshrl.u32 %v3036, 7
        %v3038 = vsub.s32 %v3035, %v3037
        %v3039 = vrot.slane %v3031, %v3038
        %v3041 = vunpack.c.l.s4 1934713408
        %v3042 = vunpack.c.0.s8 %v3041
        %v3043 = vlaneseq
        %v3044 = vshrl.u32 %v3043, 7
        %v3045 = vsub.s32 %v3042, %v3044
        %v3046 = vrot.slane %v3032, %v3045
        %v3047 = vcombine.low %v2982, %v2998
        %v3048 = vcombine.high %v2982, %v2998
        %v3050 = vunpack.c.l.s4 1934713408
        %v3051 = vunpack.c.0.s8 %v3050
        %v3052 = vlaneseq
        %v3053 = vshrl.u32 %v3052, 7
        %v3054 = vsub.s32 %v3051, %v3053
        %v3055 = vrot.slane %v3047, %v3054
        %v3057 = vunpack.c.l.s4 1934713408
        %v3058 = vunpack.c.0.s8 %v3057
        %v3059 = vlaneseq
        %v3060 = vshrl.u32 %v3059, 7
        %v3061 = vsub.s32 %v3058, %v3060
        %v3062 = vrot.slane %v3048, %v3061
        %v3063 = vcombine.low %v3007, %v3039
        %v3064 = vcombine.high %v3007, %v3039
        %v3065 = vcombine.low %v3014, %v3046
        %v3066 = vcombine.high %v3014, %v3046
        %v3067 = vcombine.low %v3023, %v3055
        %v3068 = vcombine.high %v3023, %v3055
        %v3069 = vcombine.low %v3030, %v3062
        %v3070 = vcombine.high %v3030, %v3062
        %3072 = vrot.lane.b32.xlu0 %v2928, 16
        %v3073 = vpop.permute.xlu0 %3072
        %3076 = vrot.lane.b32.xlu0 %v2929, 32
        %v3077 = vpop.permute.xlu0 %3076
        %3080 = vrot.lane.b32.xlu0 %v2930, 48
        %v3081 = vpop.permute.xlu0 %3080
        %3084 = vrot.lane.b32.xlu0 %v2931, 64
        %v3085 = vpop.permute.xlu0 %3084
        %3088 = vrot.lane.b32.xlu0 %v2932, 80
        %v3089 = vpop.permute.xlu0 %3088
        %3092 = vrot.lane.b32.xlu0 %v2933, 96
        %v3093 = vpop.permute.xlu0 %3092
        %3096 = vrot.lane.b32.xlu0 %v2934, 112
        %v3097 = vpop.permute.xlu0 %3096
        %3100 = vrot.lane.b32.xlu0 %v3064, 16
        %v3101 = vpop.permute.xlu0 %3100
        %3104 = vrot.lane.b32.xlu0 %v3065, 32
        %v3105 = vpop.permute.xlu0 %3104
        %3108 = vrot.lane.b32.xlu0 %v3066, 48
        %v3109 = vpop.permute.xlu0 %3108
        %3112 = vrot.lane.b32.xlu0 %v3067, 64
        %v3113 = vpop.permute.xlu0 %3112
        %3116 = vrot.lane.b32.xlu0 %v3068, 80
        %v3117 = vpop.permute.xlu0 %3116
        %3120 = vrot.lane.b32.xlu0 %v3069, 96
        %v3121 = vpop.permute.xlu0 %3120
        %3124 = vrot.lane.b32.xlu0 %v3070, 112
        %v3125 = vpop.permute.xlu0 %3124
        %v3127 = vsel %vm932, %v2927, %v3073
        %vm3128 = vcmask 261120
        %v3129 = vsel %vm3128, %v3127, %v3077
        %vm3130 = vcmask 392192
        %v3131 = vsel %vm3130, %v3129, %v3081
        %vm3132 = vcmask 523264
        %v3133 = vsel %vm3132, %v3131, %v3085
        %vm3134 = vcmask 654336
        %v3135 = vsel %vm3134, %v3133, %v3089
        %vm3136 = vcmask 785408
        %v3137 = vsel %vm3136, %v3135, %v3093
        %vm3138 = vcmask 916480
        %v3139 = vsel %vm3138, %v3137, %v3097
        %v3140 = vsel %vm932, %v3063, %v3101
        %v3141 = vsel %vm3128, %v3140, %v3105
        %v3142 = vsel %vm3130, %v3141, %v3109
        %v3143 = vsel %vm3132, %v3142, %v3113
        %v3144 = vsel %vm3134, %v3143, %v3117
        %v3145 = vsel %vm3136, %v3144, %v3121
        %v3146 = vsel %vm3138, %v3145, %v3125
        %3147 = vst [vmem:[%s333] sm:$0xff] %v3139
        %3148 = vst [vmem:[%s333 + $0x8] sm:$0xff] %v3146
        %s3149 = sand.u32 %s193, 1
        %s3150 = scalar_lea.sflag [#allocation5], %s3149
        %s3151 = sand.u32 %s193, 1
        %s3152 = smul.addr %s3151, 16
        %s3153 = scalar_lea.vmem [#allocation8], %s3152
        // Predicated region
        $region57: #{tpu_custom_call.1} parent=47 // pred_check
          %p3154 = pneg %p203
        $region58: #{tpu_custom_call.1} parent=47 // pred_check_branch
          %3156 = sbr.rel (%p3154) target = $region60
        $region59: #{tpu_custom_call.1} parent=47 // pred_region
          %s3158 = ssub.s32 256, 256
          %3159 = vsyncadd %s3150, %s3158
          %s3160 = smul.addr %s28, 2
          %s3161 = smul.addr %s3160, 128
          %s3162 = scalar_lea.hbm %s7, %s3161
          %s3164 = sshll.u32 %s3153, 4
          %s3165 = int_to_ptr.vmem [resolvable:$true] %s3164
          %3167 = dma.vmem_to_hbm [thread:$0]  %s3165, 256, %s3162, %s3150
        $region60: #{tpu_custom_call.1} parent=47 // pred_fallthru
          _
      $region48: #{tpu_custom_call.1} parent=5 // pred_fallthru
        _
      %p3168 = scmp.le.s32.totalorder 2, %s23
      // Predicated region
      $region61: #{tpu_custom_call.1} parent=5 // pred_check
        %p3169 = pneg %p3168
      $region62: #{tpu_custom_call.1} parent=5 // pred_check_branch
        %3171 = sbr.rel (%p3169) target = $region64
      $region63: #{tpu_custom_call.1} parent=5 // pred_region
        %s3172 = ssub.s32 %s23, 2
        // Predicated region
        $region65: #{tpu_custom_call.1} parent=63 // pred_check
          %p3173 = pneg %p209
        $region66: #{tpu_custom_call.1} parent=63 // pred_check_branch
          %3175 = sbr.rel (%p3173) target = $region68
        $region67: #{tpu_custom_call.1} parent=63 // pred_region
          %s3176 = sand.u32 %s194, 1
          %s3177 = scalar_lea.sflag [#allocation5], %s3176
          %s3178 = sand.u32 %s194, 1
          %s3179 = smul.addr %s3178, 16
          %s3180 = scalar_lea.vmem [#allocation8], %s3179
          %3181 = dma.done %s3177, 256
        $region68: #{tpu_custom_call.1} parent=63 // pred_fallthru
          _
      $region64: #{tpu_custom_call.1} parent=5 // pred_fallthru
        _
    $region6: #{tpu_custom_call.1} parent=1 // loop_footer
      %s27 = sadd.s32 1, %s23
    $region7: #{tpu_custom_call.1} parent=1 // loop_footer_branch
      %22 = sbr.rel target = $region3
    $region8: #{tpu_custom_call.1} parent=1 // loop_exit
      _
    %3182 = vsyncpa [#allocation4], 1
    %s3183 = scalar_lea.sflag [#allocation4], 1
    %3184 = vsyncpa %s3183, 1
    %3185 = vsyncpa [#allocation7], 1
    %s3186 = scalar_lea.sflag [#allocation7], 1
    %3187 = vsyncpa %s3186, 1
    %3188 = vsyncpa [#allocation5], 1
    %s3189 = scalar_lea.sflag [#allocation5], 1
    %3190 = vsyncpa %s3189, 1

</llo_original>
